<compile_context>
chip_gen: v7x
topology: tpu7x:2x2x1
jax: 0.10.0
libtpu: 0.0.40
codegen_flags: <defaults>
</compile_context>

<pallas_src>
import math

import jax
import jax.numpy as jnp
from jax.experimental import pallas as pl

# ---------------- problem sizes (small, consistent with the module) ----------
B = 2            # batch
S = 8            # seq_len
H = 32           # hidden_width
NH = 4           # num_attention_heads
DH = H // NH     # head dim
I = 64           # intermediate_width
HP = 128         # lane-padded hidden width
IP = 128         # lane-padded intermediate width
BS = B * S       # folded batch*seq rows
LN_EPS = 1e-5
NEG_INF = -1e9   # stand-in for torch.finfo(dtype).min masking


def _gelu_exact(x):
    # torch.nn.GELU default (erf-based).
    return 0.5 * x * (1.0 + jax.lax.erf(x * 0.7071067811865476))


def _layer_norm_padded(x, gamma, beta):
    # x: (N, HP) with real data in the first H columns and zeros elsewhere.
    # Biased variance over the H real columns, computed from padded sums
    # (padded columns contribute 0 to both sums).  gamma/beta are zero-padded,
    # so padded output columns stay exactly zero.
    s1 = jnp.sum(x, axis=-1, keepdims=True)
    s2 = jnp.sum(x * x, axis=-1, keepdims=True)
    mean = s1 * (1.0 / H)
    var = s2 * (1.0 / H) - mean * mean
    inv = jax.lax.rsqrt(var + LN_EPS)
    return (x - mean) * inv * gamma + beta


# ---------------- Pallas kernel: whole layer, whole batch, one invocation ----
def encoder_layer_kernel(
    x_ref, bias_ref,
    wqkv_ref, bqkv_ref, wo_ref, bo_ref,
    ln1_g_ref, ln1_b_ref,
    w1_ref, b1_ref, w2_ref, b2_ref,
    ln2_g_ref, ln2_b_ref,
    out_ref,
):
    x = x_ref[...]                       # (BS, HP) f32, zero in padded cols
    bias = bias_ref[...]                 # (BS, BS) additive mask (0 / NEG_INF)

    xb = x.astype(jnp.bfloat16)

    # ---- fused QKV projection: one (BS,HP) x (HP,3*HP) matmul, f32 accum ----
    qkv = jnp.dot(xb, wqkv_ref[...],
                  preferred_element_type=jnp.float32) + bqkv_ref[...]
    scale = 1.0 / math.sqrt(DH)
    q = qkv[:, 0 * HP:1 * HP] * scale    # fold score scaling into q once
    k = qkv[:, 1 * HP:2 * HP]
    v = qkv[:, 2 * HP:3 * HP]

    qb = q.astype(jnp.bfloat16)
    kb = k.astype(jnp.bfloat16)
    vb = v.astype(jnp.bfloat16)
    wo = wo_ref[...]                     # (HP, HP) bf16

    # ---- per-head attention, output projection folded into the head loop ----
    acc = jnp.zeros((BS, HP), jnp.float32)
    for h in range(NH):                  # static loop over heads
        lo = h * DH
        qh = qb[:, lo:lo + DH]           # (BS, DH)
        kh = kb[:, lo:lo + DH]
        vh = vb[:, lo:lo + DH]
        # scores over the flattened key axis; cross-batch + padding entries are
        # killed by the additive bias (hoisted out of the loop).
        s = jax.lax.dot_general(qh, kh, (((1,), (1,)), ((), ())),
                                preferred_element_type=jnp.float32)
        s = s + bias
        s = s - jnp.max(s, axis=-1, keepdims=True)
        p = jnp.exp(s)
        p = p * pl.reciprocal(jnp.sum(p, axis=-1, keepdims=True), approx=True)
        ctx = jnp.dot(p.astype(jnp.bfloat16), vh,
                      preferred_element_type=jnp.float32)          # (BS, DH)
        acc = acc + jnp.dot(ctx.astype(jnp.bfloat16), wo[lo:lo + DH, :],
                            preferred_element_type=jnp.float32)    # (BS, HP)
    attn_out = acc + bo_ref[...]

    # ---- residual + attn_residual_layer_norm ----
    res1 = _layer_norm_padded(x + attn_out, ln1_g_ref[...], ln1_b_ref[...])

    # ---- pointwise feed-forward (exact GELU, no gate) ----
    h1 = jnp.dot(res1.astype(jnp.bfloat16), w1_ref[...],
                 preferred_element_type=jnp.float32) + b1_ref[...]
    h1 = _gelu_exact(h1)
    ffn_out = jnp.dot(h1.astype(jnp.bfloat16), w2_ref[...],
                      preferred_element_type=jnp.float32) + b2_ref[...]

    # ---- residual + ffn_residual_layer_norm ----
    out = _layer_norm_padded(res1 + ffn_out, ln2_g_ref[...], ln2_b_ref[...])
    out_ref[...] = out.astype(out_ref.dtype)


# ---------------- wrapper: lane-dense padding + fused/packed weights ----------
def _pad2(a, rows, cols, dtype=None):
    out = jnp.zeros((rows, cols), a.dtype if dtype is None else dtype)
    return out.at[:a.shape[0], :a.shape[1]].set(a.astype(out.dtype))


def encoder_layer_pallas(x, mask, params):
    """x: (B, S, H) float32; mask: (B, S) float32 (1 = attend)."""
    bf16 = jnp.bfloat16

    # Activations as one lane-dense (B*S, 128) slab.
    x_pad = _pad2(x.reshape(BS, H), BS, HP)

    # Additive attention bias over the flattened (batch*seq) key axis: masks
    # padded keys AND cross-batch pairs so the whole batch runs as one slab.
    idx = jnp.arange(BS)
    same_batch = (idx[:, None] // S) == (idx[None, :] // S)
    key_ok = (mask.reshape(BS) > 0.5)[None, :]
    bias = jnp.where(same_batch & key_ok, 0.0, NEG_INF).astype(jnp.float32)

    # Fused, zero-padded QKV weight (HP, 3*HP) / bias (1, 3*HP).
    wqkv = jnp.zeros((HP, 3 * HP), bf16)
    wqkv = wqkv.at[:H, 0 * HP:0 * HP + H].set(params["wq"].astype(bf16))
    wqkv = wqkv.at[:H, 1 * HP:1 * HP + H].set(params["wk"].astype(bf16))
    wqkv = wqkv.at[:H, 2 * HP:2 * HP + H].set(params["wv"].astype(bf16))
    bqkv = jnp.zeros((1, 3 * HP), jnp.float32)
    bqkv = bqkv.at[:, 0 * HP:0 * HP + H].set(params["bq"])
    bqkv = bqkv.at[:, 1 * HP:1 * HP + H].set(params["bk"])
    bqkv = bqkv.at[:, 2 * HP:2 * HP + H].set(params["bv"])

    wo = _pad2(params["wo"], HP, HP, bf16)
    bo = _pad2(params["bo"], 1, HP)
    ln1_g = _pad2(params["ln1_g"], 1, HP)
    ln1_b = _pad2(params["ln1_b"], 1, HP)
    w1 = _pad2(params["w1"], HP, IP, bf16)
    b1 = _pad2(params["b1"], 1, IP)
    w2 = _pad2(params["w2"], IP, HP, bf16)
    b2 = _pad2(params["b2"], 1, HP)
    ln2_g = _pad2(params["ln2_g"], 1, HP)
    ln2_b = _pad2(params["ln2_b"], 1, HP)

    # Single invocation, no grid: every operand fits VMEM whole (<200 KiB).
    out_pad = pl.pallas_call(
        encoder_layer_kernel,
        out_shape=jax.ShapeDtypeStruct((BS, HP), jnp.float32),
    )(x_pad, bias, wqkv, bqkv, wo, bo, ln1_g, ln1_b,
      w1, b1, w2, b2, ln2_g, ln2_b)

    return out_pad[:, :H].reshape(B, S, H)


# ---------------- pure-JAX f32 reference (same math, for verification) -------
def _ln_ref(x, gamma, beta):
    mean = jnp.mean(x, axis=-1, keepdims=True)
    var = jnp.mean(jnp.square(x - mean), axis=-1, keepdims=True)
    return (x - mean) * jax.lax.rsqrt(var + LN_EPS) * gamma + beta


def encoder_layer_ref(x, mask, p):
    def one(xb, mb):
        q = xb @ p["wq"] + p["bq"][0]
        k = xb @ p["wk"] + p["bk"][0]
        v = xb @ p["wv"] + p["bv"][0]
        qh = q.reshape(S, NH, DH).transpose(1, 0, 2)
        kh = k.reshape(S, NH, DH).transpose(1, 0, 2)
        vh = v.reshape(S, NH, DH).transpose(1, 0, 2)
        s = jnp.einsum("hqd,hkd->hqk", qh, kh) / math.sqrt(DH)
        s = jnp.where(mb[None, None, :] > 0.5, s, NEG_INF)
        pr = jax.nn.softmax(s, axis=-1)
        ctx = jnp.einsum("hqk,hkd->hqd", pr, vh).transpose(1, 0, 2).reshape(S, H)
        attn_out = ctx @ p["wo"] + p["bo"][0]
        res1 = _ln_ref(xb + attn_out, p["ln1_g"][0], p["ln1_b"][0])
        h1 = _gelu_exact(res1 @ p["w1"] + p["b1"][0])
        ffn_out = h1 @ p["w2"] + p["b2"][0]
        return _ln_ref(res1 + ffn_out, p["ln2_g"][0], p["ln2_b"][0])
    return jax.vmap(one)(x, mask)


# ---------------- deterministic parameter init --------------------------------
def init_params(key):
    ks = jax.random.split(key, 8)
    n = lambda k, shape: (0.02 * jax.random.normal(k, shape)).astype(jnp.float32)
    return {
        "wq": n(ks[0], (H, H)), "bq": n(ks[1], (1, H)),
        "wk": n(ks[2], (H, H)), "bk": n(ks[3], (1, H)),
        "wv": n(ks[4], (H, H)), "bv": n(ks[5], (1, H)),
        "wo": n(ks[6], (H, H)), "bo": n(ks[7], (1, H)),
        "ln1_g": jnp.ones((1, H), jnp.float32),
        "ln1_b": jnp.zeros((1, H), jnp.float32),
        "w1": n(jax.random.fold_in(key, 100), (H, I)),
        "b1": n(jax.random.fold_in(key, 101), (1, I)),
        "w2": n(jax.random.fold_in(key, 102), (I, H)),
        "b2": n(jax.random.fold_in(key, 103), (1, H)),
        "ln2_g": jnp.ones((1, H), jnp.float32),
        "ln2_b": jnp.zeros((1, H), jnp.float32),
    }


if __name__ == "__main__":
    key = jax.random.PRNGKey(0)
    kx, kp = jax.random.split(key)
    x = jax.random.normal(kx, (B, S, H), jnp.float32)
    # attention mask: last two positions of batch 1 are padding
    mask = jnp.ones((B, S), jnp.float32).at[1, -2:].set(0.0)
    params = init_params(kp)

    out = encoder_layer_pallas(x, mask, params)
    out = jax.block_until_ready(out)

    ref = encoder_layer_ref(x, mask, params)
    assert out.shape == (B, S, H)
    # bf16 matmul inputs + approx softmax reciprocal -> small tolerance vs f32 ref.
    assert jnp.allclose(out, ref, rtol=1e-2, atol=5e-3), (
        float(jnp.max(jnp.abs(out - ref))))
    print("KERNEL_OK")
</pallas_src>

<mosaic_0001>
module attributes {stable_mosaic.version = 11 : i64} {
  func.func @encoder_layer_kernel(%arg0: memref<16x128xf32, #tpu.memory_space<vmem>>, %arg1: memref<16x16xf32, #tpu.memory_space<vmem>>, %arg2: memref<128x384xbf16, #tpu.memory_space<vmem>>, %arg3: memref<1x384xf32, #tpu.memory_space<vmem>>, %arg4: memref<128x128xbf16, #tpu.memory_space<vmem>>, %arg5: memref<1x128xf32, #tpu.memory_space<vmem>>, %arg6: memref<1x128xf32, #tpu.memory_space<vmem>>, %arg7: memref<1x128xf32, #tpu.memory_space<vmem>>, %arg8: memref<128x128xbf16, #tpu.memory_space<vmem>>, %arg9: memref<1x128xf32, #tpu.memory_space<vmem>>, %arg10: memref<128x128xbf16, #tpu.memory_space<vmem>>, %arg11: memref<1x128xf32, #tpu.memory_space<vmem>>, %arg12: memref<1x128xf32, #tpu.memory_space<vmem>>, %arg13: memref<1x128xf32, #tpu.memory_space<vmem>>, %arg14: memref<16x128xf32, #tpu.memory_space<vmem>>) attributes {dimension_semantics = [], scalar_prefetch = 0 : i64, scratch_operands = 0 : i64, tpu.core_type = #tpu.core_type<tc>} {
    %c0 = arith.constant 0 : index
    %c0_0 = arith.constant 0 : index
    %0 = vector.load %arg0[%c0, %c0_0] : memref<16x128xf32, #tpu.memory_space<vmem>>, vector<16x128xf32>
    %c0_1 = arith.constant 0 : index
    %c0_2 = arith.constant 0 : index
    %1 = vector.load %arg1[%c0_1, %c0_2] : memref<16x16xf32, #tpu.memory_space<vmem>>, vector<16x16xf32>
    %2 = arith.truncf %0 : vector<16x128xf32> to vector<16x128xbf16>
    %c0_3 = arith.constant 0 : index
    %c0_4 = arith.constant 0 : index
    %3 = vector.load %arg2[%c0_3, %c0_4] : memref<128x384xbf16, #tpu.memory_space<vmem>>, vector<128x384xbf16>
    %cst = arith.constant dense<0.000000e+00> : vector<16x384xf32>
    %4 = tpu.matmul %2, %3, %cst {dimension_numbers = #tpu.dot_dimension_numbers<[1], [0], [0], [1], [0, 0, 1, 1], [], []>} : vector<16x128xbf16>, vector<128x384xbf16>, vector<16x384xf32> -> vector<16x384xf32>
    %c0_5 = arith.constant 0 : index
    %c0_6 = arith.constant 0 : index
    %5 = vector.load %arg3[%c0_5, %c0_6] : memref<1x384xf32, #tpu.memory_space<vmem>>, vector<1x384xf32>
    %6 = vector.broadcast %5 : vector<1x384xf32> to vector<16x384xf32>
    %7 = arith.addf %4, %6 : vector<16x384xf32>
    %8 = vector.extract_strided_slice %7 {offsets = [0, 0], sizes = [16, 128], strides = [1, 1]} : vector<16x384xf32> to vector<16x128xf32>
    %cst_7 = arith.constant 0.353553385 : f32
    %9 = vector.broadcast %cst_7 : f32 to vector<16x128xf32>
    %10 = arith.mulf %8, %9 : vector<16x128xf32>
    %11 = vector.extract_strided_slice %7 {offsets = [0, 128], sizes = [16, 128], strides = [1, 1]} : vector<16x384xf32> to vector<16x128xf32>
    %12 = vector.extract_strided_slice %7 {offsets = [0, 256], sizes = [16, 128], strides = [1, 1]} : vector<16x384xf32> to vector<16x128xf32>
    %13 = arith.truncf %10 : vector<16x128xf32> to vector<16x128xbf16>
    %14 = arith.truncf %11 : vector<16x128xf32> to vector<16x128xbf16>
    %15 = arith.truncf %12 : vector<16x128xf32> to vector<16x128xbf16>
    %c0_8 = arith.constant 0 : index
    %c0_9 = arith.constant 0 : index
    %16 = vector.load %arg4[%c0_8, %c0_9] : memref<128x128xbf16, #tpu.memory_space<vmem>>, vector<128x128xbf16>
    %cst_10 = arith.constant 0.000000e+00 : f32
    %17 = vector.broadcast %cst_10 : f32 to vector<16x128xf32>
    %18 = vector.extract_strided_slice %13 {offsets = [0, 0], sizes = [16, 8], strides = [1, 1]} : vector<16x128xbf16> to vector<16x8xbf16>
    %19 = vector.extract_strided_slice %14 {offsets = [0, 0], sizes = [16, 8], strides = [1, 1]} : vector<16x128xbf16> to vector<16x8xbf16>
    %20 = vector.extract_strided_slice %15 {offsets = [0, 0], sizes = [16, 8], strides = [1, 1]} : vector<16x128xbf16> to vector<16x8xbf16>
    %cst_11 = arith.constant dense<0.000000e+00> : vector<16x16xf32>
    %21 = tpu.matmul %18, %19, %cst_11 {dimension_numbers = #tpu.dot_dimension_numbers<[1], [1], [0], [0], [0, 0, 1, 0], [], []>} : vector<16x8xbf16>, vector<16x8xbf16>, vector<16x16xf32> -> vector<16x16xf32>
    %22 = arith.addf %21, %1 : vector<16x16xf32>
    %cst_12 = arith.constant dense<0xFF800000> : vector<16xf32>
    %23 = vector.multi_reduction <maximumf>, %22, %cst_12 [1] : vector<16x16xf32> to vector<16xf32>
    %24 = vector.shape_cast %23 : vector<16xf32> to vector<16x1xf32>
    %25 = vector.broadcast %24 : vector<16x1xf32> to vector<16x16xf32>
    %26 = arith.subf %22, %25 : vector<16x16xf32>
    %27 = math.exp %26 : vector<16x16xf32>
    %cst_13 = arith.constant dense<0.000000e+00> : vector<16xf32>
    %28 = vector.multi_reduction <add>, %27, %cst_13 [1] : vector<16x16xf32> to vector<16xf32>
    %29 = vector.shape_cast %28 : vector<16xf32> to vector<16x1xf32>
    %30 = tpu.reciprocal %29 {approx = true} : vector<16x1xf32> -> vector<16x1xf32>
    %31 = vector.broadcast %30 : vector<16x1xf32> to vector<16x16xf32>
    %32 = arith.mulf %27, %31 : vector<16x16xf32>
    %33 = arith.truncf %32 : vector<16x16xf32> to vector<16x16xbf16>
    %cst_14 = arith.constant dense<0.000000e+00> : vector<16x8xf32>
    %34 = tpu.matmul %33, %20, %cst_14 {dimension_numbers = #tpu.dot_dimension_numbers<[1], [0], [0], [1], [0, 0, 1, 1], [], []>} : vector<16x16xbf16>, vector<16x8xbf16>, vector<16x8xf32> -> vector<16x8xf32>
    %35 = arith.truncf %34 : vector<16x8xf32> to vector<16x8xbf16>
    %36 = vector.extract_strided_slice %16 {offsets = [0, 0], sizes = [8, 128], strides = [1, 1]} : vector<128x128xbf16> to vector<8x128xbf16>
    %cst_15 = arith.constant dense<0.000000e+00> : vector<16x128xf32>
    %37 = tpu.matmul %35, %36, %cst_15 {dimension_numbers = #tpu.dot_dimension_numbers<[1], [0], [0], [1], [0, 0, 1, 1], [], []>} : vector<16x8xbf16>, vector<8x128xbf16>, vector<16x128xf32> -> vector<16x128xf32>
    %38 = arith.addf %17, %37 : vector<16x128xf32>
    %39 = vector.extract_strided_slice %13 {offsets = [0, 8], sizes = [16, 8], strides = [1, 1]} : vector<16x128xbf16> to vector<16x8xbf16>
    %40 = vector.extract_strided_slice %14 {offsets = [0, 8], sizes = [16, 8], strides = [1, 1]} : vector<16x128xbf16> to vector<16x8xbf16>
    %41 = vector.extract_strided_slice %15 {offsets = [0, 8], sizes = [16, 8], strides = [1, 1]} : vector<16x128xbf16> to vector<16x8xbf16>
    %cst_16 = arith.constant dense<0.000000e+00> : vector<16x16xf32>
    %42 = tpu.matmul %39, %40, %cst_16 {dimension_numbers = #tpu.dot_dimension_numbers<[1], [1], [0], [0], [0, 0, 1, 0], [], []>} : vector<16x8xbf16>, vector<16x8xbf16>, vector<16x16xf32> -> vector<16x16xf32>
    %43 = arith.addf %42, %1 : vector<16x16xf32>
    %cst_17 = arith.constant dense<0xFF800000> : vector<16xf32>
    %44 = vector.multi_reduction <maximumf>, %43, %cst_17 [1] : vector<16x16xf32> to vector<16xf32>
    %45 = vector.shape_cast %44 : vector<16xf32> to vector<16x1xf32>
    %46 = vector.broadcast %45 : vector<16x1xf32> to vector<16x16xf32>
    %47 = arith.subf %43, %46 : vector<16x16xf32>
    %48 = math.exp %47 : vector<16x16xf32>
    %cst_18 = arith.constant dense<0.000000e+00> : vector<16xf32>
    %49 = vector.multi_reduction <add>, %48, %cst_18 [1] : vector<16x16xf32> to vector<16xf32>
    %50 = vector.shape_cast %49 : vector<16xf32> to vector<16x1xf32>
    %51 = tpu.reciprocal %50 {approx = true} : vector<16x1xf32> -> vector<16x1xf32>
    %52 = vector.broadcast %51 : vector<16x1xf32> to vector<16x16xf32>
    %53 = arith.mulf %48, %52 : vector<16x16xf32>
    %54 = arith.truncf %53 : vector<16x16xf32> to vector<16x16xbf16>
    %cst_19 = arith.constant dense<0.000000e+00> : vector<16x8xf32>
    %55 = tpu.matmul %54, %41, %cst_19 {dimension_numbers = #tpu.dot_dimension_numbers<[1], [0], [0], [1], [0, 0, 1, 1], [], []>} : vector<16x16xbf16>, vector<16x8xbf16>, vector<16x8xf32> -> vector<16x8xf32>
    %56 = arith.truncf %55 : vector<16x8xf32> to vector<16x8xbf16>
    %57 = vector.extract_strided_slice %16 {offsets = [8, 0], sizes = [8, 128], strides = [1, 1]} : vector<128x128xbf16> to vector<8x128xbf16>
    %cst_20 = arith.constant dense<0.000000e+00> : vector<16x128xf32>
    %58 = tpu.matmul %56, %57, %cst_20 {dimension_numbers = #tpu.dot_dimension_numbers<[1], [0], [0], [1], [0, 0, 1, 1], [], []>} : vector<16x8xbf16>, vector<8x128xbf16>, vector<16x128xf32> -> vector<16x128xf32>
    %59 = arith.addf %38, %58 : vector<16x128xf32>
    %60 = vector.extract_strided_slice %13 {offsets = [0, 16], sizes = [16, 8], strides = [1, 1]} : vector<16x128xbf16> to vector<16x8xbf16>
    %61 = vector.extract_strided_slice %14 {offsets = [0, 16], sizes = [16, 8], strides = [1, 1]} : vector<16x128xbf16> to vector<16x8xbf16>
    %62 = vector.extract_strided_slice %15 {offsets = [0, 16], sizes = [16, 8], strides = [1, 1]} : vector<16x128xbf16> to vector<16x8xbf16>
    %cst_21 = arith.constant dense<0.000000e+00> : vector<16x16xf32>
    %63 = tpu.matmul %60, %61, %cst_21 {dimension_numbers = #tpu.dot_dimension_numbers<[1], [1], [0], [0], [0, 0, 1, 0], [], []>} : vector<16x8xbf16>, vector<16x8xbf16>, vector<16x16xf32> -> vector<16x16xf32>
    %64 = arith.addf %63, %1 : vector<16x16xf32>
    %cst_22 = arith.constant dense<0xFF800000> : vector<16xf32>
    %65 = vector.multi_reduction <maximumf>, %64, %cst_22 [1] : vector<16x16xf32> to vector<16xf32>
    %66 = vector.shape_cast %65 : vector<16xf32> to vector<16x1xf32>
    %67 = vector.broadcast %66 : vector<16x1xf32> to vector<16x16xf32>
    %68 = arith.subf %64, %67 : vector<16x16xf32>
    %69 = math.exp %68 : vector<16x16xf32>
    %cst_23 = arith.constant dense<0.000000e+00> : vector<16xf32>
    %70 = vector.multi_reduction <add>, %69, %cst_23 [1] : vector<16x16xf32> to vector<16xf32>
    %71 = vector.shape_cast %70 : vector<16xf32> to vector<16x1xf32>
    %72 = tpu.reciprocal %71 {approx = true} : vector<16x1xf32> -> vector<16x1xf32>
    %73 = vector.broadcast %72 : vector<16x1xf32> to vector<16x16xf32>
    %74 = arith.mulf %69, %73 : vector<16x16xf32>
    %75 = arith.truncf %74 : vector<16x16xf32> to vector<16x16xbf16>
    %cst_24 = arith.constant dense<0.000000e+00> : vector<16x8xf32>
    %76 = tpu.matmul %75, %62, %cst_24 {dimension_numbers = #tpu.dot_dimension_numbers<[1], [0], [0], [1], [0, 0, 1, 1], [], []>} : vector<16x16xbf16>, vector<16x8xbf16>, vector<16x8xf32> -> vector<16x8xf32>
    %77 = arith.truncf %76 : vector<16x8xf32> to vector<16x8xbf16>
    %78 = vector.extract_strided_slice %16 {offsets = [16, 0], sizes = [8, 128], strides = [1, 1]} : vector<128x128xbf16> to vector<8x128xbf16>
    %cst_25 = arith.constant dense<0.000000e+00> : vector<16x128xf32>
    %79 = tpu.matmul %77, %78, %cst_25 {dimension_numbers = #tpu.dot_dimension_numbers<[1], [0], [0], [1], [0, 0, 1, 1], [], []>} : vector<16x8xbf16>, vector<8x128xbf16>, vector<16x128xf32> -> vector<16x128xf32>
    %80 = arith.addf %59, %79 : vector<16x128xf32>
    %81 = vector.extract_strided_slice %13 {offsets = [0, 24], sizes = [16, 8], strides = [1, 1]} : vector<16x128xbf16> to vector<16x8xbf16>
    %82 = vector.extract_strided_slice %14 {offsets = [0, 24], sizes = [16, 8], strides = [1, 1]} : vector<16x128xbf16> to vector<16x8xbf16>
    %83 = vector.extract_strided_slice %15 {offsets = [0, 24], sizes = [16, 8], strides = [1, 1]} : vector<16x128xbf16> to vector<16x8xbf16>
    %cst_26 = arith.constant dense<0.000000e+00> : vector<16x16xf32>
    %84 = tpu.matmul %81, %82, %cst_26 {dimension_numbers = #tpu.dot_dimension_numbers<[1], [1], [0], [0], [0, 0, 1, 0], [], []>} : vector<16x8xbf16>, vector<16x8xbf16>, vector<16x16xf32> -> vector<16x16xf32>
    %85 = arith.addf %84, %1 : vector<16x16xf32>
    %cst_27 = arith.constant dense<0xFF800000> : vector<16xf32>
    %86 = vector.multi_reduction <maximumf>, %85, %cst_27 [1] : vector<16x16xf32> to vector<16xf32>
    %87 = vector.shape_cast %86 : vector<16xf32> to vector<16x1xf32>
    %88 = vector.broadcast %87 : vector<16x1xf32> to vector<16x16xf32>
    %89 = arith.subf %85, %88 : vector<16x16xf32>
    %90 = math.exp %89 : vector<16x16xf32>
    %cst_28 = arith.constant dense<0.000000e+00> : vector<16xf32>
    %91 = vector.multi_reduction <add>, %90, %cst_28 [1] : vector<16x16xf32> to vector<16xf32>
    %92 = vector.shape_cast %91 : vector<16xf32> to vector<16x1xf32>
    %93 = tpu.reciprocal %92 {approx = true} : vector<16x1xf32> -> vector<16x1xf32>
    %94 = vector.broadcast %93 : vector<16x1xf32> to vector<16x16xf32>
    %95 = arith.mulf %90, %94 : vector<16x16xf32>
    %96 = arith.truncf %95 : vector<16x16xf32> to vector<16x16xbf16>
    %cst_29 = arith.constant dense<0.000000e+00> : vector<16x8xf32>
    %97 = tpu.matmul %96, %83, %cst_29 {dimension_numbers = #tpu.dot_dimension_numbers<[1], [0], [0], [1], [0, 0, 1, 1], [], []>} : vector<16x16xbf16>, vector<16x8xbf16>, vector<16x8xf32> -> vector<16x8xf32>
    %98 = arith.truncf %97 : vector<16x8xf32> to vector<16x8xbf16>
    %99 = vector.extract_strided_slice %16 {offsets = [24, 0], sizes = [8, 128], strides = [1, 1]} : vector<128x128xbf16> to vector<8x128xbf16>
    %cst_30 = arith.constant dense<0.000000e+00> : vector<16x128xf32>
    %100 = tpu.matmul %98, %99, %cst_30 {dimension_numbers = #tpu.dot_dimension_numbers<[1], [0], [0], [1], [0, 0, 1, 1], [], []>} : vector<16x8xbf16>, vector<8x128xbf16>, vector<16x128xf32> -> vector<16x128xf32>
    %101 = arith.addf %80, %100 : vector<16x128xf32>
    %c0_31 = arith.constant 0 : index
    %c0_32 = arith.constant 0 : index
    %102 = vector.load %arg5[%c0_31, %c0_32] : memref<1x128xf32, #tpu.memory_space<vmem>>, vector<1x128xf32>
    %103 = vector.broadcast %102 : vector<1x128xf32> to vector<16x128xf32>
    %104 = arith.addf %101, %103 : vector<16x128xf32>
    %105 = arith.addf %0, %104 : vector<16x128xf32>
    %c0_33 = arith.constant 0 : index
    %c0_34 = arith.constant 0 : index
    %106 = vector.load %arg6[%c0_33, %c0_34] : memref<1x128xf32, #tpu.memory_space<vmem>>, vector<1x128xf32>
    %c0_35 = arith.constant 0 : index
    %c0_36 = arith.constant 0 : index
    %107 = vector.load %arg7[%c0_35, %c0_36] : memref<1x128xf32, #tpu.memory_space<vmem>>, vector<1x128xf32>
    %cst_37 = arith.constant dense<0.000000e+00> : vector<16xf32>
    %108 = vector.multi_reduction <add>, %105, %cst_37 [1] : vector<16x128xf32> to vector<16xf32>
    %109 = vector.shape_cast %108 : vector<16xf32> to vector<16x1xf32>
    %110 = arith.mulf %105, %105 : vector<16x128xf32>
    %cst_38 = arith.constant dense<0.000000e+00> : vector<16xf32>
    %111 = vector.multi_reduction <add>, %110, %cst_38 [1] : vector<16x128xf32> to vector<16xf32>
    %112 = vector.shape_cast %111 : vector<16xf32> to vector<16x1xf32>
    %cst_39 = arith.constant 3.125000e-02 : f32
    %113 = vector.broadcast %cst_39 : f32 to vector<16x1xf32>
    %114 = arith.mulf %109, %113 : vector<16x1xf32>
    %cst_40 = arith.constant 3.125000e-02 : f32
    %115 = vector.broadcast %cst_40 : f32 to vector<16x1xf32>
    %116 = arith.mulf %112, %115 : vector<16x1xf32>
    %117 = arith.mulf %114, %114 : vector<16x1xf32>
    %118 = arith.subf %116, %117 : vector<16x1xf32>
    %cst_41 = arith.constant 9.99999974E-6 : f32
    %119 = vector.broadcast %cst_41 : f32 to vector<16x1xf32>
    %120 = arith.addf %118, %119 : vector<16x1xf32>
    %121 = math.rsqrt %120 : vector<16x1xf32>
    %122 = vector.broadcast %114 : vector<16x1xf32> to vector<16x128xf32>
    %123 = arith.subf %105, %122 : vector<16x128xf32>
    %124 = vector.broadcast %121 : vector<16x1xf32> to vector<16x128xf32>
    %125 = arith.mulf %123, %124 : vector<16x128xf32>
    %126 = vector.broadcast %106 : vector<1x128xf32> to vector<16x128xf32>
    %127 = arith.mulf %125, %126 : vector<16x128xf32>
    %128 = vector.broadcast %107 : vector<1x128xf32> to vector<16x128xf32>
    %129 = arith.addf %127, %128 : vector<16x128xf32>
    %130 = arith.truncf %129 : vector<16x128xf32> to vector<16x128xbf16>
    %c0_42 = arith.constant 0 : index
    %c0_43 = arith.constant 0 : index
    %131 = vector.load %arg8[%c0_42, %c0_43] : memref<128x128xbf16, #tpu.memory_space<vmem>>, vector<128x128xbf16>
    %cst_44 = arith.constant dense<0.000000e+00> : vector<16x128xf32>
    %132 = tpu.matmul %130, %131, %cst_44 {dimension_numbers = #tpu.dot_dimension_numbers<[1], [0], [0], [1], [0, 0, 1, 1], [], []>} : vector<16x128xbf16>, vector<128x128xbf16>, vector<16x128xf32> -> vector<16x128xf32>
    %c0_45 = arith.constant 0 : index
    %c0_46 = arith.constant 0 : index
    %133 = vector.load %arg9[%c0_45, %c0_46] : memref<1x128xf32, #tpu.memory_space<vmem>>, vector<1x128xf32>
    %134 = vector.broadcast %133 : vector<1x128xf32> to vector<16x128xf32>
    %135 = arith.addf %132, %134 : vector<16x128xf32>
    %cst_47 = arith.constant 5.000000e-01 : f32
    %136 = vector.broadcast %cst_47 : f32 to vector<16x128xf32>
    %137 = arith.mulf %136, %135 : vector<16x128xf32>
    %cst_48 = arith.constant 0.707106769 : f32
    %138 = vector.broadcast %cst_48 : f32 to vector<16x128xf32>
    %139 = arith.mulf %135, %138 : vector<16x128xf32>
    %140 = math.erf %139 : vector<16x128xf32>
    %cst_49 = arith.constant 1.000000e+00 : f32
    %141 = vector.broadcast %cst_49 : f32 to vector<16x128xf32>
    %142 = arith.addf %141, %140 : vector<16x128xf32>
    %143 = arith.mulf %137, %142 : vector<16x128xf32>
    %144 = arith.truncf %143 : vector<16x128xf32> to vector<16x128xbf16>
    %c0_50 = arith.constant 0 : index
    %c0_51 = arith.constant 0 : index
    %145 = vector.load %arg10[%c0_50, %c0_51] : memref<128x128xbf16, #tpu.memory_space<vmem>>, vector<128x128xbf16>
    %cst_52 = arith.constant dense<0.000000e+00> : vector<16x128xf32>
    %146 = tpu.matmul %144, %145, %cst_52 {dimension_numbers = #tpu.dot_dimension_numbers<[1], [0], [0], [1], [0, 0, 1, 1], [], []>} : vector<16x128xbf16>, vector<128x128xbf16>, vector<16x128xf32> -> vector<16x128xf32>
    %c0_53 = arith.constant 0 : index
    %c0_54 = arith.constant 0 : index
    %147 = vector.load %arg11[%c0_53, %c0_54] : memref<1x128xf32, #tpu.memory_space<vmem>>, vector<1x128xf32>
    %148 = vector.broadcast %147 : vector<1x128xf32> to vector<16x128xf32>
    %149 = arith.addf %146, %148 : vector<16x128xf32>
    %150 = arith.addf %129, %149 : vector<16x128xf32>
    %c0_55 = arith.constant 0 : index
    %c0_56 = arith.constant 0 : index
    %151 = vector.load %arg12[%c0_55, %c0_56] : memref<1x128xf32, #tpu.memory_space<vmem>>, vector<1x128xf32>
    %c0_57 = arith.constant 0 : index
    %c0_58 = arith.constant 0 : index
    %152 = vector.load %arg13[%c0_57, %c0_58] : memref<1x128xf32, #tpu.memory_space<vmem>>, vector<1x128xf32>
    %cst_59 = arith.constant dense<0.000000e+00> : vector<16xf32>
    %153 = vector.multi_reduction <add>, %150, %cst_59 [1] : vector<16x128xf32> to vector<16xf32>
    %154 = vector.shape_cast %153 : vector<16xf32> to vector<16x1xf32>
    %155 = arith.mulf %150, %150 : vector<16x128xf32>
    %cst_60 = arith.constant dense<0.000000e+00> : vector<16xf32>
    %156 = vector.multi_reduction <add>, %155, %cst_60 [1] : vector<16x128xf32> to vector<16xf32>
    %157 = vector.shape_cast %156 : vector<16xf32> to vector<16x1xf32>
    %cst_61 = arith.constant 3.125000e-02 : f32
    %158 = vector.broadcast %cst_61 : f32 to vector<16x1xf32>
    %159 = arith.mulf %154, %158 : vector<16x1xf32>
    %cst_62 = arith.constant 3.125000e-02 : f32
    %160 = vector.broadcast %cst_62 : f32 to vector<16x1xf32>
    %161 = arith.mulf %157, %160 : vector<16x1xf32>
    %162 = arith.mulf %159, %159 : vector<16x1xf32>
    %163 = arith.subf %161, %162 : vector<16x1xf32>
    %cst_63 = arith.constant 9.99999974E-6 : f32
    %164 = vector.broadcast %cst_63 : f32 to vector<16x1xf32>
    %165 = arith.addf %163, %164 : vector<16x1xf32>
    %166 = math.rsqrt %165 : vector<16x1xf32>
    %167 = vector.broadcast %159 : vector<16x1xf32> to vector<16x128xf32>
    %168 = arith.subf %150, %167 : vector<16x128xf32>
    %169 = vector.broadcast %166 : vector<16x1xf32> to vector<16x128xf32>
    %170 = arith.mulf %168, %169 : vector<16x128xf32>
    %171 = vector.broadcast %151 : vector<1x128xf32> to vector<16x128xf32>
    %172 = arith.mulf %170, %171 : vector<16x128xf32>
    %173 = vector.broadcast %152 : vector<1x128xf32> to vector<16x128xf32>
    %174 = arith.addf %172, %173 : vector<16x128xf32>
    %c0_64 = arith.constant 0 : index
    %c0_65 = arith.constant 0 : index
    %175 = vector.load %arg14[%c0_64, %c0_65] : memref<16x128xf32, #tpu.memory_space<vmem>>, vector<16x128xf32>
    tpu.vector_store %arg14[%c0_64, %c0_65], %174 {strides = array<i32>} : memref<16x128xf32, #tpu.memory_space<vmem>>, vector<16x128xf32>,
    return
  }
}

</mosaic_0001>

<llo_original>
// kernel: tpu_custom_call.1
$region0: #{tpu_custom_call.1}
  #allocation0 [shape = 'u32[]', space=smem, size = 0x4, offset = 0x4, fixed_abs, tag = 'smem constant byte address 0x4 - core index']
  #allocation1 [shape = 'u32[144,128]{1,0:T(1,128)}', space=vmem, size = 0x12000, scoped, tag = 'internal scratch']
  %s0 = inlined_call_operand.hbm [shape: f32[16,128], index: 0, kind: input, shape index: {}]
  %s1 = inlined_call_operand.hbm [shape: f32[16,16], index: 1, kind: input, shape index: {}]
  %s2 = inlined_call_operand.hbm [shape: bf16[128,384], index: 2, kind: input, shape index: {}]
  %s3 = inlined_call_operand.vmem [shape: f32[1,384], index: 3, kind: input, shape index: {}]
  %s4 = inlined_call_operand.hbm [shape: bf16[128,128], index: 4, kind: input, shape index: {}]
  %s5 = inlined_call_operand.vmem [shape: f32[1,128], index: 5, kind: input, shape index: {}]
  %s6 = inlined_call_operand.vmem [shape: f32[1,128], index: 6, kind: input, shape index: {}]
  %s7 = inlined_call_operand.vmem [shape: f32[1,128], index: 7, kind: input, shape index: {}]
  %s8 = inlined_call_operand.hbm [shape: bf16[128,128], index: 8, kind: input, shape index: {}]
  %s9 = inlined_call_operand.vmem [shape: f32[1,128], index: 9, kind: input, shape index: {}]
  %s10 = inlined_call_operand.hbm [shape: bf16[128,128], index: 10, kind: input, shape index: {}]
  %s11 = inlined_call_operand.vmem [shape: f32[1,128], index: 11, kind: input, shape index: {}]
  %s12 = inlined_call_operand.vmem [shape: f32[1,128], index: 12, kind: input, shape index: {}]
  %s13 = inlined_call_operand.vmem [shape: f32[1,128], index: 13, kind: input, shape index: {}]
  %s14 = inlined_call_operand.hbm [shape: f32[16,128], index: 14, kind: output, shape index: {}]
  %s15 = sld [smem:[#allocation0]]
  $region90: #{tpu_custom_call.1} parent=0
    _
  %s17 = ssub.s32 1, %s15
  %s18 = scalar_select 0, %s17, %s15
  $region1: #{tpu_custom_call.1} parent=0
    #allocation2 [shape = 'u8[8192]{0}', space=vmem, size = 0x2000, scoped, tag = 'input window, operand 0, single buffered']
    #allocation3 [shape = 's32[1]{0}', space=sflag, size = 0x4, scoped, tag = 'scoped memory for tpu_custom_call.1']
    #allocation4 [shape = 's32[1]{0}', space=sflag, size = 0x4, scoped, tag = 'scoped memory for tpu_custom_call.1']
    #allocation5 [shape = 'u8[8192]{0}', space=vmem, size = 0x2000, scoped, tag = 'input window, operand 1, single buffered']
    #allocation6 [shape = 's32[1]{0}', space=sflag, size = 0x4, scoped, tag = 'scoped memory for tpu_custom_call.1']
    #allocation7 [shape = 'u8[98304]{0}', space=vmem, size = 0x18000, scoped, tag = 'input window, operand 2, single buffered']
    #allocation8 [shape = 'u8[32768]{0}', space=vmem, size = 0x8000, scoped, tag = 'input window, operand 4, single buffered']
    #allocation9 [shape = 's32[1]{0}', space=sflag, size = 0x4, scoped, tag = 'scoped memory for tpu_custom_call.1']
    #allocation10 [shape = 'u8[32768]{0}', space=vmem, size = 0x8000, scoped, tag = 'input window, operand 8, single buffered']
    #allocation11 [shape = 'u8[32768]{0}', space=vmem, size = 0x8000, scoped, tag = 'input window, operand 10, single buffered']
    #allocation12 [shape = 's32[1]{0}', space=sflag, size = 0x4, scoped, tag = 'scoped memory for tpu_custom_call.1']
    #allocation13 [shape = 'u8[8192]{0}', space=vmem, size = 0x2000, scoped, tag = 'output window, operand 0, single buffered']
    %19 = vsyncpa [#allocation3], 0
    %20 = vsyncpa [#allocation6], 0
    %21 = vsyncpa [#allocation9], 0
    %22 = vsyncpa [#allocation12], 0
    %23 = vsyncpa [#allocation4], 0
    // Predicated region
    $region2: #{tpu_custom_call.1} parent=1 // pred_check
      _
    $region3: #{tpu_custom_call.1} parent=1 // pred_check_branch
      %25 = sbr.rel (0) target = $region5
    $region4: #{tpu_custom_call.1} parent=1 // pred_region
      %s27 = ssub.s32 256, 256
      %28 = vsyncadd [#allocation3], %s27
      %s29 = sshll.u32 [#allocation2], 4
      %s30 = int_to_ptr.vmem [resolvable:$true] %s29
      %35 = dma.hbm_to_vmem [thread:$0]  %s0, 256, %s30, [#allocation3], 128, 128, 8
    $region5: #{tpu_custom_call.1} parent=1 // pred_fallthru
      _
    // Predicated region
    $region6: #{tpu_custom_call.1} parent=1 // pred_check
      _
    $region7: #{tpu_custom_call.1} parent=1 // pred_check_branch
      %37 = sbr.rel (0) target = $region9
    $region8: #{tpu_custom_call.1} parent=1 // pred_region
      %s39 = ssub.s32 256, 256
      %40 = vsyncadd [#allocation6], %s39
      %s41 = sshll.u32 [#allocation5], 4
      %s42 = int_to_ptr.vmem [resolvable:$true] %s41
      %47 = dma.hbm_to_vmem [thread:$0]  %s1, 256, %s42, [#allocation6], 128, 128, 8
    $region9: #{tpu_custom_call.1} parent=1 // pred_fallthru
      _
    // Predicated region
    $region10: #{tpu_custom_call.1} parent=1 // pred_check
      _
    $region11: #{tpu_custom_call.1} parent=1 // pred_check_branch
      %49 = sbr.rel (0) target = $region13
    $region12: #{tpu_custom_call.1} parent=1 // pred_region
      %s51 = ssub.s32 3072, 3072
      %52 = vsyncadd [#allocation6], %s51
      %s53 = sshll.u32 [#allocation7], 4
      %s54 = int_to_ptr.vmem [resolvable:$true] %s53
      %59 = dma.hbm_to_vmem [thread:$0]  %s2, 3072, %s54, [#allocation6], 192, 192, 12
    $region13: #{tpu_custom_call.1} parent=1 // pred_fallthru
      _
    // Predicated region
    $region14: #{tpu_custom_call.1} parent=1 // pred_check
      _
    $region15: #{tpu_custom_call.1} parent=1 // pred_check_branch
      %61 = sbr.rel (0) target = $region17
    $region16: #{tpu_custom_call.1} parent=1 // pred_region
      _
    $region17: #{tpu_custom_call.1} parent=1 // pred_fallthru
      _
    // Predicated region
    $region18: #{tpu_custom_call.1} parent=1 // pred_check
      _
    $region19: #{tpu_custom_call.1} parent=1 // pred_check_branch
      %63 = sbr.rel (0) target = $region21
    $region20: #{tpu_custom_call.1} parent=1 // pred_region
      %s65 = ssub.s32 1024, 1024
      %66 = vsyncadd [#allocation9], %s65
      %s67 = sshll.u32 [#allocation8], 4
      %s68 = int_to_ptr.vmem [resolvable:$true] %s67
      %73 = dma.hbm_to_vmem [thread:$0]  %s4, 1024, %s68, [#allocation9], 64, 64, 4
    $region21: #{tpu_custom_call.1} parent=1 // pred_fallthru
      _
    // Predicated region
    $region22: #{tpu_custom_call.1} parent=1 // pred_check
      _
    $region23: #{tpu_custom_call.1} parent=1 // pred_check_branch
      %75 = sbr.rel (0) target = $region25
    $region24: #{tpu_custom_call.1} parent=1 // pred_region
      _
    $region25: #{tpu_custom_call.1} parent=1 // pred_fallthru
      _
    // Predicated region
    $region26: #{tpu_custom_call.1} parent=1 // pred_check
      _
    $region27: #{tpu_custom_call.1} parent=1 // pred_check_branch
      %77 = sbr.rel (0) target = $region29
    $region28: #{tpu_custom_call.1} parent=1 // pred_region
      _
    $region29: #{tpu_custom_call.1} parent=1 // pred_fallthru
      _
    // Predicated region
    $region30: #{tpu_custom_call.1} parent=1 // pred_check
      _
    $region31: #{tpu_custom_call.1} parent=1 // pred_check_branch
      %79 = sbr.rel (0) target = $region33
    $region32: #{tpu_custom_call.1} parent=1 // pred_region
      _
    $region33: #{tpu_custom_call.1} parent=1 // pred_fallthru
      _
    // Predicated region
    $region34: #{tpu_custom_call.1} parent=1 // pred_check
      _
    $region35: #{tpu_custom_call.1} parent=1 // pred_check_branch
      %81 = sbr.rel (0) target = $region37
    $region36: #{tpu_custom_call.1} parent=1 // pred_region
      %s83 = ssub.s32 1024, 1024
      %84 = vsyncadd [#allocation9], %s83
      %s85 = sshll.u32 [#allocation10], 4
      %s86 = int_to_ptr.vmem [resolvable:$true] %s85
      %91 = dma.hbm_to_vmem [thread:$0]  %s8, 1024, %s86, [#allocation9], 64, 64, 4
    $region37: #{tpu_custom_call.1} parent=1 // pred_fallthru
      _
    // Predicated region
    $region38: #{tpu_custom_call.1} parent=1 // pred_check
      _
    $region39: #{tpu_custom_call.1} parent=1 // pred_check_branch
      %93 = sbr.rel (0) target = $region41
    $region40: #{tpu_custom_call.1} parent=1 // pred_region
      _
    $region41: #{tpu_custom_call.1} parent=1 // pred_fallthru
      _
    // Predicated region
    $region42: #{tpu_custom_call.1} parent=1 // pred_check
      _
    $region43: #{tpu_custom_call.1} parent=1 // pred_check_branch
      %95 = sbr.rel (0) target = $region45
    $region44: #{tpu_custom_call.1} parent=1 // pred_region
      %s97 = ssub.s32 1024, 1024
      %98 = vsyncadd [#allocation12], %s97
      %s99 = sshll.u32 [#allocation11], 4
      %s100 = int_to_ptr.vmem [resolvable:$true] %s99
      %105 = dma.hbm_to_vmem [thread:$0]  %s10, 1024, %s100, [#allocation12], 64, 64, 4
    $region45: #{tpu_custom_call.1} parent=1 // pred_fallthru
      _
    // Predicated region
    $region46: #{tpu_custom_call.1} parent=1 // pred_check
      _
    $region47: #{tpu_custom_call.1} parent=1 // pred_check_branch
      %107 = sbr.rel (0) target = $region49
    $region48: #{tpu_custom_call.1} parent=1 // pred_region
      _
    $region49: #{tpu_custom_call.1} parent=1 // pred_fallthru
      _
    // Predicated region
    $region50: #{tpu_custom_call.1} parent=1 // pred_check
      _
    $region51: #{tpu_custom_call.1} parent=1 // pred_check_branch
      %109 = sbr.rel (0) target = $region53
    $region52: #{tpu_custom_call.1} parent=1 // pred_region
      _
    $region53: #{tpu_custom_call.1} parent=1 // pred_fallthru
      _
    // Predicated region
    $region54: #{tpu_custom_call.1} parent=1 // pred_check
      _
    $region55: #{tpu_custom_call.1} parent=1 // pred_check_branch
      %111 = sbr.rel (0) target = $region57
    $region56: #{tpu_custom_call.1} parent=1 // pred_region
      _
    $region57: #{tpu_custom_call.1} parent=1 // pred_fallthru
      _
    // Predicated region
    $region58: #{tpu_custom_call.1} parent=1 // pred_check
      _
    $region59: #{tpu_custom_call.1} parent=1 // pred_check_branch
      %113 = sbr.rel (0) target = $region61
    $region60: #{tpu_custom_call.1} parent=1 // pred_region
      %114 = dma.done [#allocation3], 256
    $region61: #{tpu_custom_call.1} parent=1 // pred_fallthru
      _
    // Predicated region
    $region62: #{tpu_custom_call.1} parent=1 // pred_check
      _
    $region63: #{tpu_custom_call.1} parent=1 // pred_check_branch
      %116 = sbr.rel (0) target = $region65
    $region64: #{tpu_custom_call.1} parent=1 // pred_region
      %117 = dma.done [#allocation6], 256
    $region65: #{tpu_custom_call.1} parent=1 // pred_fallthru
      _
    // Predicated region
    $region66: #{tpu_custom_call.1} parent=1 // pred_check
      _
    $region67: #{tpu_custom_call.1} parent=1 // pred_check_branch
      %119 = sbr.rel (0) target = $region69
    $region68: #{tpu_custom_call.1} parent=1 // pred_region
      %120 = dma.done [#allocation6], 3072
    $region69: #{tpu_custom_call.1} parent=1 // pred_fallthru
      _
    // Predicated region
    $region70: #{tpu_custom_call.1} parent=1 // pred_check
      _
    $region71: #{tpu_custom_call.1} parent=1 // pred_check_branch
      %122 = sbr.rel (0) target = $region73
    $region72: #{tpu_custom_call.1} parent=1 // pred_region
      %123 = dma.done [#allocation9], 1024
    $region73: #{tpu_custom_call.1} parent=1 // pred_fallthru
      _
    // Predicated region
    $region74: #{tpu_custom_call.1} parent=1 // pred_check
      _
    $region75: #{tpu_custom_call.1} parent=1 // pred_check_branch
      %125 = sbr.rel (0) target = $region77
    $region76: #{tpu_custom_call.1} parent=1 // pred_region
      %126 = dma.done [#allocation9], 1024
    $region77: #{tpu_custom_call.1} parent=1 // pred_fallthru
      _
    // Predicated region
    $region78: #{tpu_custom_call.1} parent=1 // pred_check
      _
    $region79: #{tpu_custom_call.1} parent=1 // pred_check_branch
      %128 = sbr.rel (0) target = $region81
    $region80: #{tpu_custom_call.1} parent=1 // pred_region
      %129 = dma.done [#allocation12], 1024
    $region81: #{tpu_custom_call.1} parent=1 // pred_fallthru
      _
    %v131 = vld [vmem:[#allocation2] sm:$0xff]
    %v132 = vld [vmem:[#allocation2 + $0x8] sm:$0xff]
    %v133 = vld [vmem:[#allocation5] sm:$0xff]
    %v134 = vld [vmem:[#allocation5 + $0x8] sm:$0xff]
    %v135 = vpack.c.bf16 %v132, %v131
    %v136 = vld [vmem:[#allocation7] sm:$0xff]
    %v137 = vld [vmem:[#allocation7 + $0x8] sm:$0xf]
    %v138 = vld [vmem:[#allocation7 + $0xc] sm:$0xff]
    %v139 = vld [vmem:[#allocation7 + $0x14] sm:$0xf]
    %v140 = vld [vmem:[#allocation7 + $0x18] sm:$0xff]
    %v141 = vld [vmem:[#allocation7 + $0x20] sm:$0xf]
    %v142 = vld [vmem:[#allocation7 + $0x24] sm:$0xff]
    %v143 = vld [vmem:[#allocation7 + $0x2c] sm:$0xf]
    %v144 = vld [vmem:[#allocation7 + $0x30] sm:$0xff]
    %v145 = vld [vmem:[#allocation7 + $0x38] sm:$0xf]
    %v146 = vld [vmem:[#allocation7 + $0x3c] sm:$0xff]
    %v147 = vld [vmem:[#allocation7 + $0x44] sm:$0xf]
    %v148 = vld [vmem:[#allocation7 + $0x48] sm:$0xff]
    %v149 = vld [vmem:[#allocation7 + $0x50] sm:$0xf]
    %v150 = vld [vmem:[#allocation7 + $0x54] sm:$0xff]
    %v151 = vld [vmem:[#allocation7 + $0x5c] sm:$0xf]
    %v152 = vld [vmem:[#allocation7 + $0x60] sm:$0xff]
    %v153 = vld [vmem:[#allocation7 + $0x68] sm:$0xf]
    %v154 = vld [vmem:[#allocation7 + $0x6c] sm:$0xff]
    %v155 = vld [vmem:[#allocation7 + $0x74] sm:$0xf]
    %v156 = vld [vmem:[#allocation7 + $0x78] sm:$0xff]
    %v157 = vld [vmem:[#allocation7 + $0x80] sm:$0xf]
    %v158 = vld [vmem:[#allocation7 + $0x84] sm:$0xff]
    %v159 = vld [vmem:[#allocation7 + $0x8c] sm:$0xf]
    %v160 = vld [vmem:[#allocation7 + $0x90] sm:$0xff]
    %v161 = vld [vmem:[#allocation7 + $0x98] sm:$0xf]
    %v162 = vld [vmem:[#allocation7 + $0x9c] sm:$0xff]
    %v163 = vld [vmem:[#allocation7 + $0xa4] sm:$0xf]
    %v164 = vld [vmem:[#allocation7 + $0xa8] sm:$0xff]
    %v165 = vld [vmem:[#allocation7 + $0xb0] sm:$0xf]
    %v166 = vld [vmem:[#allocation7 + $0xb4] sm:$0xff]
    %v167 = vld [vmem:[#allocation7 + $0xbc] sm:$0xf]
    %v168 = vld [vmem:[%s3] sm:$0x7]
    %v170 = vlaneseq
    %v171 = vshrl.u32 %v170, 7
    %v172 = vsub.s32 0, %v171
    %v173 = vrot.slane %v168, %v172
    %v174 = vlaneseq
    %v175 = vshrl.u32 %v174, 7
    %v176 = vsub.s32 1, %v175
    %v177 = vrot.slane %v168, %v176
    %v178 = vlaneseq
    %v179 = vshrl.u32 %v178, 7
    %v180 = vsub.s32 2, %v179
    %v181 = vrot.slane %v168, %v180
    %v217 = vunpack.c.l.b16 %v136
    %v218 = vunpack.c.h.b16 %v136
    %v219 = vunpack.c.l.b16 %v137
    %v220 = vunpack.c.l.b16 %v138
    %v221 = vunpack.c.h.b16 %v138
    %v222 = vunpack.c.l.b16 %v139
    %v223 = vunpack.c.l.b16 %v140
    %v224 = vunpack.c.h.b16 %v140
    %v225 = vunpack.c.l.b16 %v141
    %v226 = vunpack.c.l.b16 %v142
    %v227 = vunpack.c.h.b16 %v142
    %v228 = vunpack.c.l.b16 %v143
    %v229 = vunpack.c.l.b16 %v144
    %v230 = vunpack.c.h.b16 %v144
    %v231 = vunpack.c.l.b16 %v145
    %v232 = vunpack.c.l.b16 %v146
    %v233 = vunpack.c.h.b16 %v146
    %v234 = vunpack.c.l.b16 %v147
    %v235 = vunpack.c.l.b16 %v148
    %v236 = vunpack.c.h.b16 %v148
    %v237 = vunpack.c.l.b16 %v149
    %v238 = vunpack.c.l.b16 %v150
    %v239 = vunpack.c.h.b16 %v150
    %v240 = vunpack.c.l.b16 %v151
    %v241 = vunpack.c.l.b16 %v152
    %v242 = vunpack.c.h.b16 %v152
    %v243 = vunpack.c.l.b16 %v153
    %v244 = vunpack.c.l.b16 %v154
    %v245 = vunpack.c.h.b16 %v154
    %v246 = vunpack.c.l.b16 %v155
    %v247 = vunpack.c.l.b16 %v156
    %v248 = vunpack.c.h.b16 %v156
    %v249 = vunpack.c.l.b16 %v157
    %v250 = vunpack.c.l.b16 %v158
    %v251 = vunpack.c.h.b16 %v158
    %v252 = vunpack.c.l.b16 %v159
    %v253 = vunpack.c.l.b16 %v160
    %v254 = vunpack.c.h.b16 %v160
    %v255 = vunpack.c.l.b16 %v161
    %v256 = vunpack.c.l.b16 %v162
    %v257 = vunpack.c.h.b16 %v162
    %v258 = vunpack.c.l.b16 %v163
    %v259 = vunpack.c.l.b16 %v164
    %v260 = vunpack.c.h.b16 %v164
    %v261 = vunpack.c.l.b16 %v165
    %v262 = vunpack.c.l.b16 %v166
    %v263 = vunpack.c.h.b16 %v166
    %v264 = vunpack.c.l.b16 %v167
    %v265 = vpack.c.b16 %v220, %v217
    %v266 = vpack.c.b16 %v221, %v218
    %v267 = vpack.c.b16 %v222, %v219
    %v268 = vpack.c.b16 %v226, %v223
    %v269 = vpack.c.b16 %v227, %v224
    %v270 = vpack.c.b16 %v228, %v225
    %v271 = vpack.c.b16 %v232, %v229
    %v272 = vpack.c.b16 %v233, %v230
    %v273 = vpack.c.b16 %v234, %v231
    %v274 = vpack.c.b16 %v238, %v235
    %v275 = vpack.c.b16 %v239, %v236
    %v276 = vpack.c.b16 %v240, %v237
    %v277 = vpack.c.b16 %v244, %v241
    %v278 = vpack.c.b16 %v245, %v242
    %v279 = vpack.c.b16 %v246, %v243
    %v280 = vpack.c.b16 %v250, %v247
    %v281 = vpack.c.b16 %v251, %v248
    %v282 = vpack.c.b16 %v252, %v249
    %v283 = vpack.c.b16 %v256, %v253
    %v284 = vpack.c.b16 %v257, %v254
    %v285 = vpack.c.b16 %v258, %v255
    %v286 = vpack.c.b16 %v262, %v259
    %v287 = vpack.c.b16 %v263, %v260
    %v288 = vpack.c.b16 %v264, %v261
    %313 = vmatprep.subr.bf16.mxu0 %v266
    %314 = vmatpush1.bf16.msra.mxu0 %v265
    %315 = vmatprep.subr.bf16.mxu0 %v269
    %316 = vmatpush1.bf16.msra.mxu0 %v268
    %317 = vmatprep.subr.bf16.mxu0 %v272
    %318 = vmatpush1.bf16.msra.mxu0 %v271
    %319 = vmatprep.subr.bf16.mxu0 %v275
    %320 = vmatpush1.bf16.msra.mxu0 %v274
    %321 = vmatprep.subr.bf16.mxu0 %v278
    %322 = vmatpush1.bf16.msra.mxu0 %v277
    %323 = vmatprep.subr.bf16.mxu0 %v281
    %324 = vmatpush1.bf16.msra.mxu0 %v280
    %325 = vmatprep.subr.bf16.mxu0 %v284
    %326 = vmatpush1.bf16.msra.mxu0 %v283
    %327 = vmatprep.subr.bf16.mxu0 %v287
    %328 = vmatpush1.bf16.msra.mxu0 %v286
    %329 = vmatprep.subr.bf16.mxu0 0
    %330 = vmatpush1.bf16.msra.mxu0 0
    %331 = vmatprep.subr.bf16.mxu0 0
    %332 = vmatpush1.bf16.msra.mxu0 0
    %333 = vmatprep.subr.bf16.mxu0 0
    %334 = vmatpush1.bf16.msra.mxu0 0
    %335 = vmatprep.subr.bf16.mxu0 0
    %336 = vmatpush1.bf16.msra.mxu0 0
    %337 = vmatprep.subr.bf16.mxu0 0
    %338 = vmatpush1.bf16.msra.mxu0 0
    %339 = vmatprep.subr.bf16.mxu0 0
    %340 = vmatpush1.bf16.msra.mxu0 0
    %341 = vmatprep.subr.bf16.mxu0 0
    %342 = vmatpush1.bf16.msra.mxu0 0
    %343 = vmatprep.subr.bf16.mxu0 0
    %344 = vmatpush1.bf16.msra.mxu0 0
    %345 = vmatprep.mubr.bf16.mxu0 0
    %346 = vmatmul.mubr.bf16.gmra.mrb[0].mxu0 %v135
    %v347 = vpop.f32.mrb[0].mxu0
    %v348 = vadd.f32 %v173, %v347
    %v349 = vpop.f32.mrb[0].mxu0
    %v350 = vadd.f32 %v177, %v349
    %v351 = vpop.f32.mrb[0].mxu0
    %v352 = vadd.f32 %v173, %v351
    %v353 = vpop.f32.mrb[0].mxu0
    %v354 = vadd.f32 %v177, %v353
    %355 = vdwg.mxu0
    %356 = vmatprep.subr.bf16.mxu0 0
    %357 = vmatpush1.bf16.msra.mxu0 %v267
    %358 = vmatprep.subr.bf16.mxu0 0
    %359 = vmatpush1.bf16.msra.mxu0 %v270
    %360 = vmatprep.subr.bf16.mxu0 0
    %361 = vmatpush1.bf16.msra.mxu0 %v273
    %362 = vmatprep.subr.bf16.mxu0 0
    %363 = vmatpush1.bf16.msra.mxu0 %v276
    %364 = vmatprep.subr.bf16.mxu0 0
    %365 = vmatpush1.bf16.msra.mxu0 %v279
    %366 = vmatprep.subr.bf16.mxu0 0
    %367 = vmatpush1.bf16.msra.mxu0 %v282
    %368 = vmatprep.subr.bf16.mxu0 0
    %369 = vmatpush1.bf16.msra.mxu0 %v285
    %370 = vmatprep.subr.bf16.mxu0 0
    %371 = vmatpush1.bf16.msra.mxu0 %v288
    %372 = vmatprep.subr.bf16.mxu0 0
    %373 = vmatpush1.bf16.msra.mxu0 0
    %374 = vmatprep.subr.bf16.mxu0 0
    %375 = vmatpush1.bf16.msra.mxu0 0
    %376 = vmatprep.subr.bf16.mxu0 0
    %377 = vmatpush1.bf16.msra.mxu0 0
    %378 = vmatprep.subr.bf16.mxu0 0
    %379 = vmatpush1.bf16.msra.mxu0 0
    %380 = vmatprep.subr.bf16.mxu0 0
    %381 = vmatpush1.bf16.msra.mxu0 0
    %382 = vmatprep.subr.bf16.mxu0 0
    %383 = vmatpush1.bf16.msra.mxu0 0
    %384 = vmatprep.subr.bf16.mxu0 0
    %385 = vmatpush1.bf16.msra.mxu0 0
    %386 = vmatprep.subr.bf16.mxu0 0
    %387 = vmatpush1.bf16.msra.mxu0 0
    %388 = vmatprep.mubr.bf16.mxu0 0
    %389 = vmatmul.mubr.bf16.gmra.mrb[0].mxu0 %v135
    %v390 = vpop.f32.mrb[0].mxu0
    %v391 = vadd.f32 %v181, %v390
    %v392 = vpop.f32.mrb[0].mxu0
    %v393 = vpop.f32.mrb[0].mxu0
    %v394 = vadd.f32 %v181, %v393
    %v395 = vpop.f32.mrb[0].mxu0
    %396 = vdwg.mxu0
    %v397 = vmul.f32 %v348, 0.35355338
    %v398 = vmul.f32 %v352, 0.35355338
    %v399 = vpack.c.bf16 %v398, %v397
    %v400 = vpack.c.bf16 %v354, %v350
    %v401 = vpack.c.bf16 %v394, %v391
    %v402 = vld [vmem:[#allocation8] sm:$0xf]
    %v403 = vld [vmem:[#allocation8 + $0x4] sm:$0xf]
    %v404 = vld [vmem:[#allocation8 + $0x8] sm:$0xf]
    %v405 = vld [vmem:[#allocation8 + $0xc] sm:$0xf]
    %vm406 = vcmask 64512
    %v408 = vsel %vm406, %v399, 0
    %v411 = vsel %vm406, %v400, 0
    %413 = vmatprep.subr.bf16.mxu0 0
    %414 = vmatpush1.bf16.xpose.msra.mxu0 %v411
    %415 = vmatprep.subr.bf16.mxu0 0
    %416 = vmatpush1.bf16.xpose.msra.mxu0 0
    %417 = vmatprep.subr.bf16.mxu0 0
    %418 = vmatpush1.bf16.xpose.msra.mxu0 0
    %419 = vmatprep.subr.bf16.mxu0 0
    %420 = vmatpush1.bf16.xpose.msra.mxu0 0
    %421 = vmatprep.subr.bf16.mxu0 0
    %422 = vmatpush1.bf16.xpose.msra.mxu0 0
    %423 = vmatprep.subr.bf16.mxu0 0
    %424 = vmatpush1.bf16.xpose.msra.mxu0 0
    %425 = vmatprep.subr.bf16.mxu0 0
    %426 = vmatpush1.bf16.xpose.msra.mxu0 0
    %427 = vmatprep.subr.bf16.mxu0 0
    %428 = vmatpush1.bf16.xpose.msra.mxu0 0
    %429 = vmatprep.subr.bf16.mxu0 0
    %430 = vmatpush1.bf16.xpose.msra.mxu0 0
    %431 = vmatprep.subr.bf16.mxu0 0
    %432 = vmatpush1.bf16.xpose.msra.mxu0 0
    %433 = vmatprep.subr.bf16.mxu0 0
    %434 = vmatpush1.bf16.xpose.msra.mxu0 0
    %435 = vmatprep.subr.bf16.mxu0 0
    %436 = vmatpush1.bf16.xpose.msra.mxu0 0
    %437 = vmatprep.subr.bf16.mxu0 0
    %438 = vmatpush1.bf16.xpose.msra.mxu0 0
    %439 = vmatprep.subr.bf16.mxu0 0
    %440 = vmatpush1.bf16.xpose.msra.mxu0 0
    %441 = vmatprep.subr.bf16.mxu0 0
    %442 = vmatpush1.bf16.xpose.msra.mxu0 0
    %443 = vmatprep.subr.bf16.mxu0 0
    %444 = vmatpush1.bf16.xpose.msra.mxu0 0
    %445 = vmatprep.mubr.bf16.mxu0 0
    %446 = vmatmul.mubr.bf16.gmra.mrb[0].mxu0 %v408
    %v447 = vpop.f32.mrb[0].mxu0
    %v448 = vadd.f32 %v133, %v447
    %v449 = vpop.f32.mrb[0].mxu0
    %v450 = vpop.f32.mrb[0].mxu0
    %v451 = vadd.f32 %v134, %v450
    %v452 = vpop.f32.mrb[0].mxu0
    %453 = vdwg.mxu0
    %vm454 = vcmask 130048
    %v455 = vsel %vm454, %v448, -inf
    %456 = vmax.xlane.f32.xlu0 %v455
    %v457 = vpop.xlane.xlu0 %456
    %v458 = vsel %vm454, %v451, -inf
    %459 = vmax.xlane.f32.xlu0 %v458
    %v460 = vpop.xlane.xlu0 %459
    %v461 = vsub.f32 %v448, %v457
    %v462 = vsub.f32 %v451, %v460
    %v463 = vmul.f32 %v461, 1.442695
    %v464 = vpow.pop %v463
    %v465 = vmul.f32 %v462, 1.442695
    %v466 = vpow.pop %v465
    %v467 = vsel %vm454, %v464, 0.0
    %468 = vadd.xlane.f32.xlu0 %v467
    %v469 = vpop.xlane.xlu0 %468
    %v470 = vsel %vm454, %v466, 0.0
    %471 = vadd.xlane.f32.xlu0 %v470
    %v472 = vpop.xlane.xlu0 %471
    %v473 = vrcp.pop %v469
    %v474 = vrcp.pop %v472
    %v475 = vmul.f32 %v464, %v473
    %v476 = vmul.f32 %v466, %v474
    %v477 = vpack.c.bf16 %v476, %v475
    %v479 = vsel %vm454, %v477, 0
    %481 = vmatprep.subr.bf16.mxu0 0
    %482 = vmatpush1.bf16.msra.mxu0 %v401
    %483 = vmatprep.subr.bf16.mxu0 0
    %484 = vmatpush1.bf16.msra.mxu0 0
    %485 = vmatprep.subr.bf16.mxu0 0
    %486 = vmatpush1.bf16.msra.mxu0 0
    %487 = vmatprep.subr.bf16.mxu0 0
    %488 = vmatpush1.bf16.msra.mxu0 0
    %489 = vmatprep.subr.bf16.mxu0 0
    %490 = vmatpush1.bf16.msra.mxu0 0
    %491 = vmatprep.subr.bf16.mxu0 0
    %492 = vmatpush1.bf16.msra.mxu0 0
    %493 = vmatprep.subr.bf16.mxu0 0
    %494 = vmatpush1.bf16.msra.mxu0 0
    %495 = vmatprep.subr.bf16.mxu0 0
    %496 = vmatpush1.bf16.msra.mxu0 0
    %497 = vmatprep.subr.bf16.mxu0 0
    %498 = vmatpush1.bf16.msra.mxu0 0
    %499 = vmatprep.subr.bf16.mxu0 0
    %500 = vmatpush1.bf16.msra.mxu0 0
    %501 = vmatprep.subr.bf16.mxu0 0
    %502 = vmatpush1.bf16.msra.mxu0 0
    %503 = vmatprep.subr.bf16.mxu0 0
    %504 = vmatpush1.bf16.msra.mxu0 0
    %505 = vmatprep.subr.bf16.mxu0 0
    %506 = vmatpush1.bf16.msra.mxu0 0
    %507 = vmatprep.subr.bf16.mxu0 0
    %508 = vmatpush1.bf16.msra.mxu0 0
    %509 = vmatprep.subr.bf16.mxu0 0
    %510 = vmatpush1.bf16.msra.mxu0 0
    %511 = vmatprep.subr.bf16.mxu0 0
    %512 = vmatpush1.bf16.msra.mxu0 0
    %513 = vmatprep.mubr.bf16.mxu0 0
    %514 = vmatmul.mubr.bf16.gmra.mrb[0].mxu0 %v479
    %v515 = vpop.f32.mrb[0].mxu0
    %v516 = vadd.f32 0.0, %v515
    %v517 = vpop.f32.mrb[0].mxu0
    %v518 = vpop.f32.mrb[0].mxu0
    %v519 = vadd.f32 0.0, %v518
    %v520 = vpop.f32.mrb[0].mxu0
    %521 = vdwg.mxu0
    %v522 = vpack.c.bf16 %v519, %v516
    %524 = vrot.lane.b32.xlu0 %v399, 120
    %v525 = vpop.permute.xlu0 %524
    %527 = vrot.lane.b32.xlu0 %v400, 120
    %v528 = vpop.permute.xlu0 %527
    %v530 = vsel %vm406, %v525, 0
    %v533 = vsel %vm406, %v528, 0
    %535 = vmatprep.subr.bf16.mxu0 0
    %536 = vmatpush1.bf16.xpose.msra.mxu0 %v533
    %537 = vmatprep.subr.bf16.mxu0 0
    %538 = vmatpush1.bf16.xpose.msra.mxu0 0
    %539 = vmatprep.subr.bf16.mxu0 0
    %540 = vmatpush1.bf16.xpose.msra.mxu0 0
    %541 = vmatprep.subr.bf16.mxu0 0
    %542 = vmatpush1.bf16.xpose.msra.mxu0 0
    %543 = vmatprep.subr.bf16.mxu0 0
    %544 = vmatpush1.bf16.xpose.msra.mxu0 0
    %545 = vmatprep.subr.bf16.mxu0 0
    %546 = vmatpush1.bf16.xpose.msra.mxu0 0
    %547 = vmatprep.subr.bf16.mxu0 0
    %548 = vmatpush1.bf16.xpose.msra.mxu0 0
    %549 = vmatprep.subr.bf16.mxu0 0
    %550 = vmatpush1.bf16.xpose.msra.mxu0 0
    %551 = vmatprep.subr.bf16.mxu0 0
    %552 = vmatpush1.bf16.xpose.msra.mxu0 0
    %553 = vmatprep.subr.bf16.mxu0 0
    %554 = vmatpush1.bf16.xpose.msra.mxu0 0
    %555 = vmatprep.subr.bf16.mxu0 0
    %556 = vmatpush1.bf16.xpose.msra.mxu0 0
    %557 = vmatprep.subr.bf16.mxu0 0
    %558 = vmatpush1.bf16.xpose.msra.mxu0 0
    %559 = vmatprep.subr.bf16.mxu0 0
    %560 = vmatpush1.bf16.xpose.msra.mxu0 0
    %561 = vmatprep.subr.bf16.mxu0 0
    %562 = vmatpush1.bf16.xpose.msra.mxu0 0
    %563 = vmatprep.subr.bf16.mxu0 0
    %564 = vmatpush1.bf16.xpose.msra.mxu0 0
    %565 = vmatprep.subr.bf16.mxu0 0
    %566 = vmatpush1.bf16.xpose.msra.mxu0 0
    %567 = vmatprep.mubr.bf16.mxu0 0
    %568 = vmatmul.mubr.bf16.gmra.mrb[0].mxu0 %v530
    %v569 = vpop.f32.mrb[0].mxu0
    %v570 = vadd.f32 %v133, %v569
    %v571 = vpop.f32.mrb[0].mxu0
    %v572 = vpop.f32.mrb[0].mxu0
    %v573 = vadd.f32 %v134, %v572
    %v574 = vpop.f32.mrb[0].mxu0
    %575 = vdwg.mxu0
    %v576 = vsel %vm454, %v570, -inf
    %577 = vmax.xlane.f32.xlu0 %v576
    %v578 = vpop.xlane.xlu0 %577
    %v579 = vsel %vm454, %v573, -inf
    %580 = vmax.xlane.f32.xlu0 %v579
    %v581 = vpop.xlane.xlu0 %580
    %v582 = vsub.f32 %v570, %v578
    %v583 = vsub.f32 %v573, %v581
    %v584 = vmul.f32 %v582, 1.442695
    %v585 = vpow.pop %v584
    %v586 = vmul.f32 %v583, 1.442695
    %v587 = vpow.pop %v586
    %v588 = vsel %vm454, %v585, 0.0
    %589 = vadd.xlane.f32.xlu0 %v588
    %v590 = vpop.xlane.xlu0 %589
    %v591 = vsel %vm454, %v587, 0.0
    %592 = vadd.xlane.f32.xlu0 %v591
    %v593 = vpop.xlane.xlu0 %592
    %v594 = vrcp.pop %v590
    %v595 = vrcp.pop %v593
    %v596 = vmul.f32 %v585, %v594
    %v597 = vmul.f32 %v587, %v595
    %v598 = vpack.c.bf16 %v597, %v596
    %600 = vrot.lane.b32.xlu0 %v401, 120
    %v601 = vpop.permute.xlu0 %600
    %v604 = vsel %vm454, %v598, 0
    %606 = vmatprep.subr.bf16.mxu0 0
    %607 = vmatpush1.bf16.msra.mxu0 %v601
    %608 = vmatprep.subr.bf16.mxu0 0
    %609 = vmatpush1.bf16.msra.mxu0 0
    %610 = vmatprep.subr.bf16.mxu0 0
    %611 = vmatpush1.bf16.msra.mxu0 0
    %612 = vmatprep.subr.bf16.mxu0 0
    %613 = vmatpush1.bf16.msra.mxu0 0
    %614 = vmatprep.subr.bf16.mxu0 0
    %615 = vmatpush1.bf16.msra.mxu0 0
    %616 = vmatprep.subr.bf16.mxu0 0
    %617 = vmatpush1.bf16.msra.mxu0 0
    %618 = vmatprep.subr.bf16.mxu0 0
    %619 = vmatpush1.bf16.msra.mxu0 0
    %620 = vmatprep.subr.bf16.mxu0 0
    %621 = vmatpush1.bf16.msra.mxu0 0
    %622 = vmatprep.subr.bf16.mxu0 0
    %623 = vmatpush1.bf16.msra.mxu0 0
    %624 = vmatprep.subr.bf16.mxu0 0
    %625 = vmatpush1.bf16.msra.mxu0 0
    %626 = vmatprep.subr.bf16.mxu0 0
    %627 = vmatpush1.bf16.msra.mxu0 0
    %628 = vmatprep.subr.bf16.mxu0 0
    %629 = vmatpush1.bf16.msra.mxu0 0
    %630 = vmatprep.subr.bf16.mxu0 0
    %631 = vmatpush1.bf16.msra.mxu0 0
    %632 = vmatprep.subr.bf16.mxu0 0
    %633 = vmatpush1.bf16.msra.mxu0 0
    %634 = vmatprep.subr.bf16.mxu0 0
    %635 = vmatpush1.bf16.msra.mxu0 0
    %636 = vmatprep.subr.bf16.mxu0 0
    %637 = vmatpush1.bf16.msra.mxu0 0
    %638 = vmatprep.mubr.bf16.mxu0 0
    %639 = vmatmul.mubr.bf16.gmra.mrb[0].mxu0 %v604
    %v640 = vpop.f32.mrb[0].mxu0
    %v641 = vadd.f32 0.0, %v640
    %v642 = vpop.f32.mrb[0].mxu0
    %v643 = vpop.f32.mrb[0].mxu0
    %v644 = vadd.f32 0.0, %v643
    %v645 = vpop.f32.mrb[0].mxu0
    %646 = vdwg.mxu0
    %v647 = vpack.c.bf16 %v644, %v641
    %v649 = vsel %vm406, %v647, 0
    %vm651 = vcmask 1043456
    %v653 = vsel %vm651, %v403, 0
    %655 = vmatprep.subr.bf16.mxu0 0
    %656 = vmatpush1.bf16.msra.mxu0 %v653
    %657 = vmatprep.subr.bf16.mxu0 0
    %658 = vmatpush1.bf16.msra.mxu0 0
    %659 = vmatprep.subr.bf16.mxu0 0
    %660 = vmatpush1.bf16.msra.mxu0 0
    %661 = vmatprep.subr.bf16.mxu0 0
    %662 = vmatpush1.bf16.msra.mxu0 0
    %663 = vmatprep.subr.bf16.mxu0 0
    %664 = vmatpush1.bf16.msra.mxu0 0
    %665 = vmatprep.subr.bf16.mxu0 0
    %666 = vmatpush1.bf16.msra.mxu0 0
    %667 = vmatprep.subr.bf16.mxu0 0
    %668 = vmatpush1.bf16.msra.mxu0 0
    %669 = vmatprep.subr.bf16.mxu0 0
    %670 = vmatpush1.bf16.msra.mxu0 0
    %671 = vmatprep.subr.bf16.mxu0 0
    %672 = vmatpush1.bf16.msra.mxu0 0
    %673 = vmatprep.subr.bf16.mxu0 0
    %674 = vmatpush1.bf16.msra.mxu0 0
    %675 = vmatprep.subr.bf16.mxu0 0
    %676 = vmatpush1.bf16.msra.mxu0 0
    %677 = vmatprep.subr.bf16.mxu0 0
    %678 = vmatpush1.bf16.msra.mxu0 0
    %679 = vmatprep.subr.bf16.mxu0 0
    %680 = vmatpush1.bf16.msra.mxu0 0
    %681 = vmatprep.subr.bf16.mxu0 0
    %682 = vmatpush1.bf16.msra.mxu0 0
    %683 = vmatprep.subr.bf16.mxu0 0
    %684 = vmatpush1.bf16.msra.mxu0 0
    %685 = vmatprep.subr.bf16.mxu0 0
    %686 = vmatpush1.bf16.msra.mxu0 0
    %687 = vmatprep.mubr.bf16.mxu0 0
    %688 = vmatmul.mubr.bf16.gmra.mrb[0].mxu0 %v649
    %v689 = vpop.f32.mrb[0].mxu0
    %v690 = vadd.f32 0.0, %v689
    %v691 = vpop.f32.mrb[0].mxu0
    %v692 = vpop.f32.mrb[0].mxu0
    %v693 = vadd.f32 0.0, %v692
    %v694 = vpop.f32.mrb[0].mxu0
    %695 = vdwg.mxu0
    %v697 = vsel %vm406, %v522, 0
    %v700 = vsel %vm651, %v402, 0
    %702 = vmatprep.subr.bf16.mxu0 0
    %703 = vmatpush1.bf16.msra.mxu0 %v700
    %704 = vmatprep.subr.bf16.mxu0 0
    %705 = vmatpush1.bf16.msra.mxu0 0
    %706 = vmatprep.subr.bf16.mxu0 0
    %707 = vmatpush1.bf16.msra.mxu0 0
    %708 = vmatprep.subr.bf16.mxu0 0
    %709 = vmatpush1.bf16.msra.mxu0 0
    %710 = vmatprep.subr.bf16.mxu0 0
    %711 = vmatpush1.bf16.msra.mxu0 0
    %712 = vmatprep.subr.bf16.mxu0 0
    %713 = vmatpush1.bf16.msra.mxu0 0
    %714 = vmatprep.subr.bf16.mxu0 0
    %715 = vmatpush1.bf16.msra.mxu0 0
    %716 = vmatprep.subr.bf16.mxu0 0
    %717 = vmatpush1.bf16.msra.mxu0 0
    %718 = vmatprep.subr.bf16.mxu0 0
    %719 = vmatpush1.bf16.msra.mxu0 0
    %720 = vmatprep.subr.bf16.mxu0 0
    %721 = vmatpush1.bf16.msra.mxu0 0
    %722 = vmatprep.subr.bf16.mxu0 0
    %723 = vmatpush1.bf16.msra.mxu0 0
    %724 = vmatprep.subr.bf16.mxu0 0
    %725 = vmatpush1.bf16.msra.mxu0 0
    %726 = vmatprep.subr.bf16.mxu0 0
    %727 = vmatpush1.bf16.msra.mxu0 0
    %728 = vmatprep.subr.bf16.mxu0 0
    %729 = vmatpush1.bf16.msra.mxu0 0
    %730 = vmatprep.subr.bf16.mxu0 0
    %731 = vmatpush1.bf16.msra.mxu0 0
    %732 = vmatprep.subr.bf16.mxu0 0
    %733 = vmatpush1.bf16.msra.mxu0 0
    %734 = vmatprep.mubr.bf16.mxu0 0
    %735 = vmatmul.mubr.bf16.gmra.mrb[0].mxu0 %v697
    %v736 = vpop.f32.mrb[0].mxu0
    %v737 = vadd.f32 %v690, %v736
    %v738 = vpop.f32.mrb[0].mxu0
    %v739 = vpop.f32.mrb[0].mxu0
    %v740 = vadd.f32 %v693, %v739
    %v741 = vpop.f32.mrb[0].mxu0
    %742 = vdwg.mxu0
    %743 = vrot.lane.b32.xlu0 %v399, 112
    %v744 = vpop.permute.xlu0 %743
    %745 = vrot.lane.b32.xlu0 %v400, 112
    %v746 = vpop.permute.xlu0 %745
    %v748 = vsel %vm406, %v744, 0
    %v751 = vsel %vm406, %v746, 0
    %753 = vmatprep.subr.bf16.mxu0 0
    %754 = vmatpush1.bf16.xpose.msra.mxu0 %v751
    %755 = vmatprep.subr.bf16.mxu0 0
    %756 = vmatpush1.bf16.xpose.msra.mxu0 0
    %757 = vmatprep.subr.bf16.mxu0 0
    %758 = vmatpush1.bf16.xpose.msra.mxu0 0
    %759 = vmatprep.subr.bf16.mxu0 0
    %760 = vmatpush1.bf16.xpose.msra.mxu0 0
    %761 = vmatprep.subr.bf16.mxu0 0
    %762 = vmatpush1.bf16.xpose.msra.mxu0 0
    %763 = vmatprep.subr.bf16.mxu0 0
    %764 = vmatpush1.bf16.xpose.msra.mxu0 0
    %765 = vmatprep.subr.bf16.mxu0 0
    %766 = vmatpush1.bf16.xpose.msra.mxu0 0
    %767 = vmatprep.subr.bf16.mxu0 0
    %768 = vmatpush1.bf16.xpose.msra.mxu0 0
    %769 = vmatprep.subr.bf16.mxu0 0
    %770 = vmatpush1.bf16.xpose.msra.mxu0 0
    %771 = vmatprep.subr.bf16.mxu0 0
    %772 = vmatpush1.bf16.xpose.msra.mxu0 0
    %773 = vmatprep.subr.bf16.mxu0 0
    %774 = vmatpush1.bf16.xpose.msra.mxu0 0
    %775 = vmatprep.subr.bf16.mxu0 0
    %776 = vmatpush1.bf16.xpose.msra.mxu0 0
    %777 = vmatprep.subr.bf16.mxu0 0
    %778 = vmatpush1.bf16.xpose.msra.mxu0 0
    %779 = vmatprep.subr.bf16.mxu0 0
    %780 = vmatpush1.bf16.xpose.msra.mxu0 0
    %781 = vmatprep.subr.bf16.mxu0 0
    %782 = vmatpush1.bf16.xpose.msra.mxu0 0
    %783 = vmatprep.subr.bf16.mxu0 0
    %784 = vmatpush1.bf16.xpose.msra.mxu0 0
    %785 = vmatprep.mubr.bf16.mxu0 0
    %786 = vmatmul.mubr.bf16.gmra.mrb[0].mxu0 %v748
    %v787 = vpop.f32.mrb[0].mxu0
    %v788 = vadd.f32 %v133, %v787
    %v789 = vpop.f32.mrb[0].mxu0
    %v790 = vpop.f32.mrb[0].mxu0
    %v791 = vadd.f32 %v134, %v790
    %v792 = vpop.f32.mrb[0].mxu0
    %793 = vdwg.mxu0
    %v794 = vsel %vm454, %v788, -inf
    %795 = vmax.xlane.f32.xlu0 %v794
    %v796 = vpop.xlane.xlu0 %795
    %v797 = vsel %vm454, %v791, -inf
    %798 = vmax.xlane.f32.xlu0 %v797
    %v799 = vpop.xlane.xlu0 %798
    %v800 = vsub.f32 %v788, %v796
    %v801 = vsub.f32 %v791, %v799
    %v802 = vmul.f32 %v800, 1.442695
    %v803 = vpow.pop %v802
    %v804 = vmul.f32 %v801, 1.442695
    %v805 = vpow.pop %v804
    %v806 = vsel %vm454, %v803, 0.0
    %807 = vadd.xlane.f32.xlu0 %v806
    %v808 = vpop.xlane.xlu0 %807
    %v809 = vsel %vm454, %v805, 0.0
    %810 = vadd.xlane.f32.xlu0 %v809
    %v811 = vpop.xlane.xlu0 %810
    %v812 = vrcp.pop %v808
    %v813 = vrcp.pop %v811
    %v814 = vmul.f32 %v803, %v812
    %v815 = vmul.f32 %v805, %v813
    %v816 = vpack.c.bf16 %v815, %v814
    %817 = vrot.lane.b32.xlu0 %v401, 112
    %v818 = vpop.permute.xlu0 %817
    %v821 = vsel %vm454, %v816, 0
    %823 = vmatprep.subr.bf16.mxu0 0
    %824 = vmatpush1.bf16.msra.mxu0 %v818
    %825 = vmatprep.subr.bf16.mxu0 0
    %826 = vmatpush1.bf16.msra.mxu0 0
    %827 = vmatprep.subr.bf16.mxu0 0
    %828 = vmatpush1.bf16.msra.mxu0 0
    %829 = vmatprep.subr.bf16.mxu0 0
    %830 = vmatpush1.bf16.msra.mxu0 0
    %831 = vmatprep.subr.bf16.mxu0 0
    %832 = vmatpush1.bf16.msra.mxu0 0
    %833 = vmatprep.subr.bf16.mxu0 0
    %834 = vmatpush1.bf16.msra.mxu0 0
    %835 = vmatprep.subr.bf16.mxu0 0
    %836 = vmatpush1.bf16.msra.mxu0 0
    %837 = vmatprep.subr.bf16.mxu0 0
    %838 = vmatpush1.bf16.msra.mxu0 0
    %839 = vmatprep.subr.bf16.mxu0 0
    %840 = vmatpush1.bf16.msra.mxu0 0
    %841 = vmatprep.subr.bf16.mxu0 0
    %842 = vmatpush1.bf16.msra.mxu0 0
    %843 = vmatprep.subr.bf16.mxu0 0
    %844 = vmatpush1.bf16.msra.mxu0 0
    %845 = vmatprep.subr.bf16.mxu0 0
    %846 = vmatpush1.bf16.msra.mxu0 0
    %847 = vmatprep.subr.bf16.mxu0 0
    %848 = vmatpush1.bf16.msra.mxu0 0
    %849 = vmatprep.subr.bf16.mxu0 0
    %850 = vmatpush1.bf16.msra.mxu0 0
    %851 = vmatprep.subr.bf16.mxu0 0
    %852 = vmatpush1.bf16.msra.mxu0 0
    %853 = vmatprep.subr.bf16.mxu0 0
    %854 = vmatpush1.bf16.msra.mxu0 0
    %855 = vmatprep.mubr.bf16.mxu0 0
    %856 = vmatmul.mubr.bf16.gmra.mrb[0].mxu0 %v821
    %v857 = vpop.f32.mrb[0].mxu0
    %v858 = vadd.f32 0.0, %v857
    %v859 = vpop.f32.mrb[0].mxu0
    %v860 = vpop.f32.mrb[0].mxu0
    %v861 = vadd.f32 0.0, %v860
    %v862 = vpop.f32.mrb[0].mxu0
    %863 = vdwg.mxu0
    %v864 = vpack.c.bf16 %v861, %v858
    %v866 = vsel %vm406, %v864, 0
    %v869 = vsel %vm651, %v404, 0
    %871 = vmatprep.subr.bf16.mxu0 0
    %872 = vmatpush1.bf16.msra.mxu0 %v869
    %873 = vmatprep.subr.bf16.mxu0 0
    %874 = vmatpush1.bf16.msra.mxu0 0
    %875 = vmatprep.subr.bf16.mxu0 0
    %876 = vmatpush1.bf16.msra.mxu0 0
    %877 = vmatprep.subr.bf16.mxu0 0
    %878 = vmatpush1.bf16.msra.mxu0 0
    %879 = vmatprep.subr.bf16.mxu0 0
    %880 = vmatpush1.bf16.msra.mxu0 0
    %881 = vmatprep.subr.bf16.mxu0 0
    %882 = vmatpush1.bf16.msra.mxu0 0
    %883 = vmatprep.subr.bf16.mxu0 0
    %884 = vmatpush1.bf16.msra.mxu0 0
    %885 = vmatprep.subr.bf16.mxu0 0
    %886 = vmatpush1.bf16.msra.mxu0 0
    %887 = vmatprep.subr.bf16.mxu0 0
    %888 = vmatpush1.bf16.msra.mxu0 0
    %889 = vmatprep.subr.bf16.mxu0 0
    %890 = vmatpush1.bf16.msra.mxu0 0
    %891 = vmatprep.subr.bf16.mxu0 0
    %892 = vmatpush1.bf16.msra.mxu0 0
    %893 = vmatprep.subr.bf16.mxu0 0
    %894 = vmatpush1.bf16.msra.mxu0 0
    %895 = vmatprep.subr.bf16.mxu0 0
    %896 = vmatpush1.bf16.msra.mxu0 0
    %897 = vmatprep.subr.bf16.mxu0 0
    %898 = vmatpush1.bf16.msra.mxu0 0
    %899 = vmatprep.subr.bf16.mxu0 0
    %900 = vmatpush1.bf16.msra.mxu0 0
    %901 = vmatprep.subr.bf16.mxu0 0
    %902 = vmatpush1.bf16.msra.mxu0 0
    %903 = vmatprep.mubr.bf16.mxu0 0
    %904 = vmatmul.mubr.bf16.gmra.mrb[0].mxu0 %v866
    %v905 = vpop.f32.mrb[0].mxu0
    %v906 = vadd.f32 0.0, %v905
    %v907 = vpop.f32.mrb[0].mxu0
    %v908 = vpop.f32.mrb[0].mxu0
    %v909 = vadd.f32 0.0, %v908
    %v910 = vpop.f32.mrb[0].mxu0
    %911 = vdwg.mxu0
    %v912 = vadd.f32 %v737, %v906
    %v913 = vadd.f32 %v740, %v909
    %914 = vrot.lane.b32.xlu0 %v399, 104
    %v915 = vpop.permute.xlu0 %914
    %916 = vrot.lane.b32.xlu0 %v400, 104
    %v917 = vpop.permute.xlu0 %916
    %v919 = vsel %vm406, %v915, 0
    %v922 = vsel %vm406, %v917, 0
    %924 = vmatprep.subr.bf16.mxu0 0
    %925 = vmatpush1.bf16.xpose.msra.mxu0 %v922
    %926 = vmatprep.subr.bf16.mxu0 0
    %927 = vmatpush1.bf16.xpose.msra.mxu0 0
    %928 = vmatprep.subr.bf16.mxu0 0
    %929 = vmatpush1.bf16.xpose.msra.mxu0 0
    %930 = vmatprep.subr.bf16.mxu0 0
    %931 = vmatpush1.bf16.xpose.msra.mxu0 0
    %932 = vmatprep.subr.bf16.mxu0 0
    %933 = vmatpush1.bf16.xpose.msra.mxu0 0
    %934 = vmatprep.subr.bf16.mxu0 0
    %935 = vmatpush1.bf16.xpose.msra.mxu0 0
    %936 = vmatprep.subr.bf16.mxu0 0
    %937 = vmatpush1.bf16.xpose.msra.mxu0 0
    %938 = vmatprep.subr.bf16.mxu0 0
    %939 = vmatpush1.bf16.xpose.msra.mxu0 0
    %940 = vmatprep.subr.bf16.mxu0 0
    %941 = vmatpush1.bf16.xpose.msra.mxu0 0
    %942 = vmatprep.subr.bf16.mxu0 0
    %943 = vmatpush1.bf16.xpose.msra.mxu0 0
    %944 = vmatprep.subr.bf16.mxu0 0
    %945 = vmatpush1.bf16.xpose.msra.mxu0 0
    %946 = vmatprep.subr.bf16.mxu0 0
    %947 = vmatpush1.bf16.xpose.msra.mxu0 0
    %948 = vmatprep.subr.bf16.mxu0 0
    %949 = vmatpush1.bf16.xpose.msra.mxu0 0
    %950 = vmatprep.subr.bf16.mxu0 0
    %951 = vmatpush1.bf16.xpose.msra.mxu0 0
    %952 = vmatprep.subr.bf16.mxu0 0
    %953 = vmatpush1.bf16.xpose.msra.mxu0 0
    %954 = vmatprep.subr.bf16.mxu0 0
    %955 = vmatpush1.bf16.xpose.msra.mxu0 0
    %956 = vmatprep.mubr.bf16.mxu0 0
    %957 = vmatmul.mubr.bf16.gmra.mrb[0].mxu0 %v919
    %v958 = vpop.f32.mrb[0].mxu0
    %v959 = vadd.f32 %v133, %v958
    %v960 = vpop.f32.mrb[0].mxu0
    %v961 = vpop.f32.mrb[0].mxu0
    %v962 = vadd.f32 %v134, %v961
    %v963 = vpop.f32.mrb[0].mxu0
    %964 = vdwg.mxu0
    %v965 = vsel %vm454, %v959, -inf
    %966 = vmax.xlane.f32.xlu0 %v965
    %v967 = vpop.xlane.xlu0 %966
    %v968 = vsel %vm454, %v962, -inf
    %969 = vmax.xlane.f32.xlu0 %v968
    %v970 = vpop.xlane.xlu0 %969
    %v971 = vsub.f32 %v959, %v967
    %v972 = vsub.f32 %v962, %v970
    %v973 = vmul.f32 %v971, 1.442695
    %v974 = vpow.pop %v973
    %v975 = vmul.f32 %v972, 1.442695
    %v976 = vpow.pop %v975
    %v977 = vsel %vm454, %v974, 0.0
    %978 = vadd.xlane.f32.xlu0 %v977
    %v979 = vpop.xlane.xlu0 %978
    %v980 = vsel %vm454, %v976, 0.0
    %981 = vadd.xlane.f32.xlu0 %v980
    %v982 = vpop.xlane.xlu0 %981
    %v983 = vrcp.pop %v979
    %v984 = vrcp.pop %v982
    %v985 = vmul.f32 %v974, %v983
    %v986 = vmul.f32 %v976, %v984
    %v987 = vpack.c.bf16 %v986, %v985
    %988 = vrot.lane.b32.xlu0 %v401, 104
    %v989 = vpop.permute.xlu0 %988
    %v992 = vsel %vm454, %v987, 0
    %994 = vmatprep.subr.bf16.mxu0 0
    %995 = vmatpush1.bf16.msra.mxu0 %v989
    %996 = vmatprep.subr.bf16.mxu0 0
    %997 = vmatpush1.bf16.msra.mxu0 0
    %998 = vmatprep.subr.bf16.mxu0 0
    %999 = vmatpush1.bf16.msra.mxu0 0
    %1000 = vmatprep.subr.bf16.mxu0 0
    %1001 = vmatpush1.bf16.msra.mxu0 0
    %1002 = vmatprep.subr.bf16.mxu0 0
    %1003 = vmatpush1.bf16.msra.mxu0 0
    %1004 = vmatprep.subr.bf16.mxu0 0
    %1005 = vmatpush1.bf16.msra.mxu0 0
    %1006 = vmatprep.subr.bf16.mxu0 0
    %1007 = vmatpush1.bf16.msra.mxu0 0
    %1008 = vmatprep.subr.bf16.mxu0 0
    %1009 = vmatpush1.bf16.msra.mxu0 0
    %1010 = vmatprep.subr.bf16.mxu0 0
    %1011 = vmatpush1.bf16.msra.mxu0 0
    %1012 = vmatprep.subr.bf16.mxu0 0
    %1013 = vmatpush1.bf16.msra.mxu0 0
    %1014 = vmatprep.subr.bf16.mxu0 0
    %1015 = vmatpush1.bf16.msra.mxu0 0
    %1016 = vmatprep.subr.bf16.mxu0 0
    %1017 = vmatpush1.bf16.msra.mxu0 0
    %1018 = vmatprep.subr.bf16.mxu0 0
    %1019 = vmatpush1.bf16.msra.mxu0 0
    %1020 = vmatprep.subr.bf16.mxu0 0
    %1021 = vmatpush1.bf16.msra.mxu0 0
    %1022 = vmatprep.subr.bf16.mxu0 0
    %1023 = vmatpush1.bf16.msra.mxu0 0
    %1024 = vmatprep.subr.bf16.mxu0 0
    %1025 = vmatpush1.bf16.msra.mxu0 0
    %1026 = vmatprep.mubr.bf16.mxu0 0
    %1027 = vmatmul.mubr.bf16.gmra.mrb[0].mxu0 %v992
    %v1028 = vpop.f32.mrb[0].mxu0
    %v1029 = vadd.f32 0.0, %v1028
    %v1030 = vpop.f32.mrb[0].mxu0
    %v1031 = vpop.f32.mrb[0].mxu0
    %v1032 = vadd.f32 0.0, %v1031
    %v1033 = vpop.f32.mrb[0].mxu0
    %1034 = vdwg.mxu0
    %v1035 = vpack.c.bf16 %v1032, %v1029
    %v1037 = vsel %vm406, %v1035, 0
    %v1040 = vsel %vm651, %v405, 0
    %1042 = vmatprep.subr.bf16.mxu0 0
    %1043 = vmatpush1.bf16.msra.mxu0 %v1040
    %1044 = vmatprep.subr.bf16.mxu0 0
    %1045 = vmatpush1.bf16.msra.mxu0 0
    %1046 = vmatprep.subr.bf16.mxu0 0
    %1047 = vmatpush1.bf16.msra.mxu0 0
    %1048 = vmatprep.subr.bf16.mxu0 0
    %1049 = vmatpush1.bf16.msra.mxu0 0
    %1050 = vmatprep.subr.bf16.mxu0 0
    %1051 = vmatpush1.bf16.msra.mxu0 0
    %1052 = vmatprep.subr.bf16.mxu0 0
    %1053 = vmatpush1.bf16.msra.mxu0 0
    %1054 = vmatprep.subr.bf16.mxu0 0
    %1055 = vmatpush1.bf16.msra.mxu0 0
    %1056 = vmatprep.subr.bf16.mxu0 0
    %1057 = vmatpush1.bf16.msra.mxu0 0
    %1058 = vmatprep.subr.bf16.mxu0 0
    %1059 = vmatpush1.bf16.msra.mxu0 0
    %1060 = vmatprep.subr.bf16.mxu0 0
    %1061 = vmatpush1.bf16.msra.mxu0 0
    %1062 = vmatprep.subr.bf16.mxu0 0
    %1063 = vmatpush1.bf16.msra.mxu0 0
    %1064 = vmatprep.subr.bf16.mxu0 0
    %1065 = vmatpush1.bf16.msra.mxu0 0
    %1066 = vmatprep.subr.bf16.mxu0 0
    %1067 = vmatpush1.bf16.msra.mxu0 0
    %1068 = vmatprep.subr.bf16.mxu0 0
    %1069 = vmatpush1.bf16.msra.mxu0 0
    %1070 = vmatprep.subr.bf16.mxu0 0
    %1071 = vmatpush1.bf16.msra.mxu0 0
    %1072 = vmatprep.subr.bf16.mxu0 0
    %1073 = vmatpush1.bf16.msra.mxu0 0
    %1074 = vmatprep.mubr.bf16.mxu0 0
    %1075 = vmatmul.mubr.bf16.gmra.mrb[0].mxu0 %v1037
    %v1076 = vpop.f32.mrb[0].mxu0
    %v1077 = vadd.f32 0.0, %v1076
    %v1078 = vpop.f32.mrb[0].mxu0
    %v1079 = vpop.f32.mrb[0].mxu0
    %v1080 = vadd.f32 0.0, %v1079
    %v1081 = vpop.f32.mrb[0].mxu0
    %1082 = vdwg.mxu0
    %v1083 = vadd.f32 %v912, %v1077
    %v1084 = vadd.f32 %v913, %v1080
    %v1085 = vld [vmem:[%s5] sm:$0x1]
    %v1087 = vlaneseq
    %v1088 = vshrl.u32 %v1087, 7
    %v1089 = vsub.s32 0, %v1088
    %v1090 = vrot.slane %v1085, %v1089
    %v1092 = vadd.f32 %v1083, %v1090
    %v1093 = vadd.f32 %v1084, %v1090
    %v1094 = vadd.f32 %v131, %v1092
    %v1095 = vadd.f32 %v132, %v1093
    %v1096 = vld [vmem:[%s6] sm:$0x1]
    %v1097 = vld [vmem:[%s7] sm:$0x1]
    %1098 = vadd.xlane.f32.xlu0 %v1094
    %v1099 = vpop.xlane.xlu0 %1098
    %1100 = vadd.xlane.f32.xlu0 %v1095
    %v1101 = vpop.xlane.xlu0 %1100
    %v1102 = vmul.f32 %v1094, %v1094
    %v1103 = vmul.f32 %v1095, %v1095
    %1104 = vadd.xlane.f32.xlu0 %v1102
    %v1105 = vpop.xlane.xlu0 %1104
    %1106 = vadd.xlane.f32.xlu0 %v1103
    %v1107 = vpop.xlane.xlu0 %1106
    %v1108 = vmul.f32 %v1099, 0.03125
    %v1109 = vmul.f32 %v1101, 0.03125
    %v1110 = vmul.f32 %v1105, 0.03125
    %v1111 = vmul.f32 %v1107, 0.03125
    %v1112 = vmul.f32 %v1108, %v1108
    %v1113 = vmul.f32 %v1109, %v1109
    %v1114 = vsub.f32 %v1110, %v1112
    %v1115 = vsub.f32 %v1111, %v1113
    %v1116 = vadd.f32 %v1114, 1e-05
    %v1117 = vadd.f32 %v1115, 1e-05
    %v1118 = vrsqrt.pop %v1116
    %v1119 = vrsqrt.pop %v1117
    %v1120 = vsub.f32 %v1094, %v1108
    %v1121 = vsub.f32 %v1095, %v1109
    %v1122 = vmul.f32 %v1120, %v1118
    %v1123 = vmul.f32 %v1121, %v1119
    %v1125 = vlaneseq
    %v1126 = vshrl.u32 %v1125, 7
    %v1127 = vsub.s32 0, %v1126
    %v1128 = vrot.slane %v1096, %v1127
    %v1130 = vmul.f32 %v1122, %v1128
    %v1131 = vmul.f32 %v1123, %v1128
    %v1133 = vlaneseq
    %v1134 = vshrl.u32 %v1133, 7
    %v1135 = vsub.s32 0, %v1134
    %v1136 = vrot.slane %v1097, %v1135
    %v1138 = vadd.f32 %v1130, %v1136
    %v1139 = vadd.f32 %v1131, %v1136
    %v1140 = vpack.c.bf16 %v1139, %v1138
    %v1141 = vld [vmem:[#allocation10] sm:$0xf]
    %v1142 = vld [vmem:[#allocation10 + $0x4] sm:$0xf]
    %v1143 = vld [vmem:[#allocation10 + $0x8] sm:$0xf]
    %v1144 = vld [vmem:[#allocation10 + $0xc] sm:$0xf]
    %v1145 = vld [vmem:[#allocation10 + $0x10] sm:$0xf]
    %v1146 = vld [vmem:[#allocation10 + $0x14] sm:$0xf]
    %v1147 = vld [vmem:[#allocation10 + $0x18] sm:$0xf]
    %v1148 = vld [vmem:[#allocation10 + $0x1c] sm:$0xf]
    %v1149 = vld [vmem:[#allocation10 + $0x20] sm:$0xf]
    %v1150 = vld [vmem:[#allocation10 + $0x24] sm:$0xf]
    %v1151 = vld [vmem:[#allocation10 + $0x28] sm:$0xf]
    %v1152 = vld [vmem:[#allocation10 + $0x2c] sm:$0xf]
    %v1153 = vld [vmem:[#allocation10 + $0x30] sm:$0xf]
    %v1154 = vld [vmem:[#allocation10 + $0x34] sm:$0xf]
    %v1155 = vld [vmem:[#allocation10 + $0x38] sm:$0xf]
    %v1156 = vld [vmem:[#allocation10 + $0x3c] sm:$0xf]
    %v1157 = vld [vmem:[%s9] sm:$0x1]
    %v1159 = vlaneseq
    %v1160 = vshrl.u32 %v1159, 7
    %v1161 = vsub.s32 0, %v1160
    %v1162 = vrot.slane %v1157, %v1161
    %v1180 = vunpack.c.l.b16 %v1141
    %v1181 = vunpack.c.l.b16 %v1142
    %v1182 = vunpack.c.l.b16 %v1143
    %v1183 = vunpack.c.l.b16 %v1144
    %v1184 = vunpack.c.l.b16 %v1145
    %v1185 = vunpack.c.l.b16 %v1146
    %v1186 = vunpack.c.l.b16 %v1147
    %v1187 = vunpack.c.l.b16 %v1148
    %v1188 = vunpack.c.l.b16 %v1149
    %v1189 = vunpack.c.l.b16 %v1150
    %v1190 = vunpack.c.l.b16 %v1151
    %v1191 = vunpack.c.l.b16 %v1152
    %v1192 = vunpack.c.l.b16 %v1153
    %v1193 = vunpack.c.l.b16 %v1154
    %v1194 = vunpack.c.l.b16 %v1155
    %v1195 = vunpack.c.l.b16 %v1156
    %v1196 = vpack.c.b16 %v1181, %v1180
    %v1197 = vpack.c.b16 %v1183, %v1182
    %v1198 = vpack.c.b16 %v1185, %v1184
    %v1199 = vpack.c.b16 %v1187, %v1186
    %v1200 = vpack.c.b16 %v1189, %v1188
    %v1201 = vpack.c.b16 %v1191, %v1190
    %v1202 = vpack.c.b16 %v1193, %v1192
    %v1203 = vpack.c.b16 %v1195, %v1194
    %1212 = vmatprep.subr.bf16.mxu0 0
    %1213 = vmatpush1.bf16.msra.mxu0 %v1196
    %1214 = vmatprep.subr.bf16.mxu0 0
    %1215 = vmatpush1.bf16.msra.mxu0 %v1197
    %1216 = vmatprep.subr.bf16.mxu0 0
    %1217 = vmatpush1.bf16.msra.mxu0 %v1198
    %1218 = vmatprep.subr.bf16.mxu0 0
    %1219 = vmatpush1.bf16.msra.mxu0 %v1199
    %1220 = vmatprep.subr.bf16.mxu0 0
    %1221 = vmatpush1.bf16.msra.mxu0 %v1200
    %1222 = vmatprep.subr.bf16.mxu0 0
    %1223 = vmatpush1.bf16.msra.mxu0 %v1201
    %1224 = vmatprep.subr.bf16.mxu0 0
    %1225 = vmatpush1.bf16.msra.mxu0 %v1202
    %1226 = vmatprep.subr.bf16.mxu0 0
    %1227 = vmatpush1.bf16.msra.mxu0 %v1203
    %1228 = vmatprep.subr.bf16.mxu0 0
    %1229 = vmatpush1.bf16.msra.mxu0 0
    %1230 = vmatprep.subr.bf16.mxu0 0
    %1231 = vmatpush1.bf16.msra.mxu0 0
    %1232 = vmatprep.subr.bf16.mxu0 0
    %1233 = vmatpush1.bf16.msra.mxu0 0
    %1234 = vmatprep.subr.bf16.mxu0 0
    %1235 = vmatpush1.bf16.msra.mxu0 0
    %1236 = vmatprep.subr.bf16.mxu0 0
    %1237 = vmatpush1.bf16.msra.mxu0 0
    %1238 = vmatprep.subr.bf16.mxu0 0
    %1239 = vmatpush1.bf16.msra.mxu0 0
    %1240 = vmatprep.subr.bf16.mxu0 0
    %1241 = vmatpush1.bf16.msra.mxu0 0
    %1242 = vmatprep.subr.bf16.mxu0 0
    %1243 = vmatpush1.bf16.msra.mxu0 0
    %1244 = vmatprep.mubr.bf16.mxu0 0
    %1245 = vmatmul.mubr.bf16.gmra.mrb[0].mxu0 %v1140
    %v1246 = vpop.f32.mrb[0].mxu0
    %v1247 = vadd.f32 %v1162, %v1246
    %v1248 = vpop.f32.mrb[0].mxu0
    %v1249 = vpop.f32.mrb[0].mxu0
    %v1250 = vadd.f32 %v1162, %v1249
    %v1251 = vpop.f32.mrb[0].mxu0
    %1252 = vdwg.mxu0
    %v1253 = vmul.f32 %v1247, 0.5
    %v1254 = vmul.f32 %v1250, 0.5
    %v1255 = vmul.f32 %v1247, 0.70710677
    %v1256 = vmul.f32 %v1250, 0.70710677
    %v1257 = verf.f32.pop %v1255
    %v1258 = verf.f32.pop %v1256
    %v1259 = vadd.f32 %v1257, 1.0
    %v1260 = vadd.f32 %v1258, 1.0
    %v1261 = vmul.f32 %v1253, %v1259
    %v1262 = vmul.f32 %v1254, %v1260
    %v1263 = vpack.c.bf16 %v1262, %v1261
    %v1264 = vld [vmem:[#allocation11] sm:$0xf]
    %v1265 = vld [vmem:[#allocation11 + $0x4] sm:$0xf]
    %v1266 = vld [vmem:[#allocation11 + $0x8] sm:$0xf]
    %v1267 = vld [vmem:[#allocation11 + $0xc] sm:$0xf]
    %v1268 = vld [vmem:[#allocation11 + $0x10] sm:$0xf]
    %v1269 = vld [vmem:[#allocation11 + $0x14] sm:$0xf]
    %v1270 = vld [vmem:[#allocation11 + $0x18] sm:$0xf]
    %v1271 = vld [vmem:[#allocation11 + $0x1c] sm:$0xf]
    %v1272 = vld [vmem:[#allocation11 + $0x20] sm:$0xf]
    %v1273 = vld [vmem:[#allocation11 + $0x24] sm:$0xf]
    %v1274 = vld [vmem:[#allocation11 + $0x28] sm:$0xf]
    %v1275 = vld [vmem:[#allocation11 + $0x2c] sm:$0xf]
    %v1276 = vld [vmem:[#allocation11 + $0x30] sm:$0xf]
    %v1277 = vld [vmem:[#allocation11 + $0x34] sm:$0xf]
    %v1278 = vld [vmem:[#allocation11 + $0x38] sm:$0xf]
    %v1279 = vld [vmem:[#allocation11 + $0x3c] sm:$0xf]
    %v1280 = vld [vmem:[%s11] sm:$0x1]
    %v1282 = vlaneseq
    %v1283 = vshrl.u32 %v1282, 7
    %v1284 = vsub.s32 0, %v1283
    %v1285 = vrot.slane %v1280, %v1284
    %v1303 = vunpack.c.l.b16 %v1264
    %v1304 = vunpack.c.l.b16 %v1265
    %v1305 = vunpack.c.l.b16 %v1266
    %v1306 = vunpack.c.l.b16 %v1267
    %v1307 = vunpack.c.l.b16 %v1268
    %v1308 = vunpack.c.l.b16 %v1269
    %v1309 = vunpack.c.l.b16 %v1270
    %v1310 = vunpack.c.l.b16 %v1271
    %v1311 = vunpack.c.l.b16 %v1272
    %v1312 = vunpack.c.l.b16 %v1273
    %v1313 = vunpack.c.l.b16 %v1274
    %v1314 = vunpack.c.l.b16 %v1275
    %v1315 = vunpack.c.l.b16 %v1276
    %v1316 = vunpack.c.l.b16 %v1277
    %v1317 = vunpack.c.l.b16 %v1278
    %v1318 = vunpack.c.l.b16 %v1279
    %v1319 = vpack.c.b16 %v1304, %v1303
    %v1320 = vpack.c.b16 %v1306, %v1305
    %v1321 = vpack.c.b16 %v1308, %v1307
    %v1322 = vpack.c.b16 %v1310, %v1309
    %v1323 = vpack.c.b16 %v1312, %v1311
    %v1324 = vpack.c.b16 %v1314, %v1313
    %v1325 = vpack.c.b16 %v1316, %v1315
    %v1326 = vpack.c.b16 %v1318, %v1317
    %1335 = vmatprep.subr.bf16.mxu0 0
    %1336 = vmatpush1.bf16.msra.mxu0 %v1319
    %1337 = vmatprep.subr.bf16.mxu0 0
    %1338 = vmatpush1.bf16.msra.mxu0 %v1320
    %1339 = vmatprep.subr.bf16.mxu0 0
    %1340 = vmatpush1.bf16.msra.mxu0 %v1321
    %1341 = vmatprep.subr.bf16.mxu0 0
    %1342 = vmatpush1.bf16.msra.mxu0 %v1322
    %1343 = vmatprep.subr.bf16.mxu0 0
    %1344 = vmatpush1.bf16.msra.mxu0 %v1323
    %1345 = vmatprep.subr.bf16.mxu0 0
    %1346 = vmatpush1.bf16.msra.mxu0 %v1324
    %1347 = vmatprep.subr.bf16.mxu0 0
    %1348 = vmatpush1.bf16.msra.mxu0 %v1325
    %1349 = vmatprep.subr.bf16.mxu0 0
    %1350 = vmatpush1.bf16.msra.mxu0 %v1326
    %1351 = vmatprep.subr.bf16.mxu0 0
    %1352 = vmatpush1.bf16.msra.mxu0 0
    %1353 = vmatprep.subr.bf16.mxu0 0
    %1354 = vmatpush1.bf16.msra.mxu0 0
    %1355 = vmatprep.subr.bf16.mxu0 0
    %1356 = vmatpush1.bf16.msra.mxu0 0
    %1357 = vmatprep.subr.bf16.mxu0 0
    %1358 = vmatpush1.bf16.msra.mxu0 0
    %1359 = vmatprep.subr.bf16.mxu0 0
    %1360 = vmatpush1.bf16.msra.mxu0 0
    %1361 = vmatprep.subr.bf16.mxu0 0
    %1362 = vmatpush1.bf16.msra.mxu0 0
    %1363 = vmatprep.subr.bf16.mxu0 0
    %1364 = vmatpush1.bf16.msra.mxu0 0
    %1365 = vmatprep.subr.bf16.mxu0 0
    %1366 = vmatpush1.bf16.msra.mxu0 0
    %1367 = vmatprep.mubr.bf16.mxu0 0
    %1368 = vmatmul.mubr.bf16.gmra.mrb[0].mxu0 %v1263
    %v1369 = vpop.f32.mrb[0].mxu0
    %v1370 = vadd.f32 %v1285, %v1369
    %v1371 = vpop.f32.mrb[0].mxu0
    %v1372 = vpop.f32.mrb[0].mxu0
    %v1373 = vadd.f32 %v1285, %v1372
    %v1374 = vpop.f32.mrb[0].mxu0
    %1375 = vdwg.mxu0
    %v1376 = vadd.f32 %v1138, %v1370
    %v1377 = vadd.f32 %v1139, %v1373
    %v1378 = vld [vmem:[%s12] sm:$0x1]
    %v1379 = vld [vmem:[%s13] sm:$0x1]
    %1380 = vadd.xlane.f32.xlu0 %v1376
    %v1381 = vpop.xlane.xlu0 %1380
    %1382 = vadd.xlane.f32.xlu0 %v1377
    %v1383 = vpop.xlane.xlu0 %1382
    %v1384 = vmul.f32 %v1376, %v1376
    %v1385 = vmul.f32 %v1377, %v1377
    %1386 = vadd.xlane.f32.xlu0 %v1384
    %v1387 = vpop.xlane.xlu0 %1386
    %1388 = vadd.xlane.f32.xlu0 %v1385
    %v1389 = vpop.xlane.xlu0 %1388
    %v1390 = vmul.f32 %v1381, 0.03125
    %v1391 = vmul.f32 %v1383, 0.03125
    %v1392 = vmul.f32 %v1387, 0.03125
    %v1393 = vmul.f32 %v1389, 0.03125
    %v1394 = vmul.f32 %v1390, %v1390
    %v1395 = vmul.f32 %v1391, %v1391
    %v1396 = vsub.f32 %v1392, %v1394
    %v1397 = vsub.f32 %v1393, %v1395
    %v1398 = vadd.f32 %v1396, 1e-05
    %v1399 = vadd.f32 %v1397, 1e-05
    %v1400 = vrsqrt.pop %v1398
    %v1401 = vrsqrt.pop %v1399
    %v1402 = vsub.f32 %v1376, %v1390
    %v1403 = vsub.f32 %v1377, %v1391
    %v1404 = vmul.f32 %v1402, %v1400
    %v1405 = vmul.f32 %v1403, %v1401
    %v1407 = vlaneseq
    %v1408 = vshrl.u32 %v1407, 7
    %v1409 = vsub.s32 0, %v1408
    %v1410 = vrot.slane %v1378, %v1409
    %v1412 = vmul.f32 %v1404, %v1410
    %v1413 = vmul.f32 %v1405, %v1410
    %v1415 = vlaneseq
    %v1416 = vshrl.u32 %v1415, 7
    %v1417 = vsub.s32 0, %v1416
    %v1418 = vrot.slane %v1379, %v1417
    %v1420 = vadd.f32 %v1412, %v1418
    %v1421 = vadd.f32 %v1413, %v1418
    %1422 = vst [vmem:[#allocation13] sm:$0xff] %v1420
    %1423 = vst [vmem:[#allocation13 + $0x8] sm:$0xff] %v1421
    // Predicated region
    $region82: #{tpu_custom_call.1} parent=1 // pred_check
      _
    $region83: #{tpu_custom_call.1} parent=1 // pred_check_branch
      %1425 = sbr.rel (0) target = $region85
    $region84: #{tpu_custom_call.1} parent=1 // pred_region
      %s1427 = ssub.s32 256, 256
      %1428 = vsyncadd [#allocation4], %s1427
      %s1429 = sshll.u32 [#allocation13], 4
      %s1430 = int_to_ptr.vmem [resolvable:$true] %s1429
      %1435 = dma.vmem_to_hbm [thread:$0]  %s1430, 256, %s14, [#allocation4], 128, 128, 8
    $region85: #{tpu_custom_call.1} parent=1 // pred_fallthru
      _
    // Predicated region
    $region86: #{tpu_custom_call.1} parent=1 // pred_check
      _
    $region87: #{tpu_custom_call.1} parent=1 // pred_check_branch
      %1437 = sbr.rel (0) target = $region89
    $region88: #{tpu_custom_call.1} parent=1 // pred_region
      %1438 = dma.done [#allocation4], 256
    $region89: #{tpu_custom_call.1} parent=1 // pred_fallthru
      _
    %1439 = vsyncpa [#allocation3], 1
    %1440 = vsyncpa [#allocation6], 1
    %1441 = vsyncpa [#allocation9], 1
    %1442 = vsyncpa [#allocation12], 1
    %1443 = vsyncpa [#allocation4], 1

</llo_original>
